<compile_context>
chip_gen: v5e
topology: v5e:2x2
jax: 0.10.0
libtpu: 0.0.40
codegen_flags: <defaults>
</compile_context>

<pallas_src>
import functools

import numpy as np
import jax
import jax.numpy as jnp
from jax.experimental import pallas as pl
from jax.experimental.pallas import tpu as pltpu


# ----------------------------------------------------------------------------
# Fused forward kernel: one batch block (bb images) per grid step.
# ----------------------------------------------------------------------------
def _seqnet_fused_kernel(x_ref, w1_ref, b1_ref, w2a_ref, w2s_ref, b2_ref,
                         w3_ref, b3_ref, w4_ref, b4_ref, o_ref, *, hh, bb):
    """Whole SeqNet forward for a block of `bb` images.

    Rows inside the block are ho-major / image-minor:  row r = ho*bb + j
    (ho = conv2 output row, j = image within the block), so every slice below
    is a static, contiguous, vreg-aligned window.

    x_ref  : [hh*bb, 4*W*Cin] bf16  lane-concat of conv1's 4 row taps
                                    (xe0|xo0|xe1|xo1), mean already subtracted.
    w1_ref : [4*W*Cin, 2*W*C1] bf16 conv1 (1/std folded), taps stacked along K;
                                    lanes [:W*C1] -> even conv1 rows, rest odd.
    w2a_ref: [2*W*C1, WO*C2]  bf16  conv2 taps kh=1 (ev) / kh=2 (od), K-stacked.
    w2s_ref: [W*C1,   WO*C2]  bf16  conv2 tap kh=0 (shifted odd conv1 rows).
    w3_ref : [HO, WO*C2, HID] bf16  fc1 with NCHW-flatten permutation folded in.
    w4_ref : [HID, 128]       bf16  fc2, N zero-padded to a full lane width.
    o_ref  : [bb, 128]        f32   logits (first n_class lanes valid).
    """
    f32 = jnp.float32
    bf16 = jnp.bfloat16
    m = hh * bb

    x = x_ref[...]                                              # [m, 4*W*Cin]

    # conv1 + ReLU for both output-row parities: one K-stacked MXU pass.
    a1 = jnp.dot(x, w1_ref[...], preferred_element_type=f32)    # [m, 2*W*C1]
    a1 = jnp.maximum(a1 + b1_ref[...], 0.0)
    lanes = a1.shape[-1] // 2                                   # W*C1

    # conv2's kh=0 tap reads conv1 row (2*ho - 1): the odd conv1 rows shifted
    # down by one output row (= bb rows in this layout), zero for ho == 0.
    # Built fully in-register (vreg-aligned slice + concat), no VMEM scratch.
    od_f = a1[:, lanes:]
    sh = jnp.concatenate(
        [jnp.zeros((bb, lanes), f32), od_f[:m - bb, :]], axis=0).astype(bf16)
    a1 = a1.astype(bf16)                                        # (ev | od)

    # conv2 (stride 2) + ReLU.
    acc2 = (jnp.dot(a1, w2a_ref[...], preferred_element_type=f32)
            + jnp.dot(sh, w2s_ref[...], preferred_element_type=f32))
    a2 = jnp.maximum(acc2 + b2_ref[...], 0.0)                   # [m, WO*C2]

    # fc1 + ReLU: contract over (ho, conv2 features).  ho-major rows make each
    # ho's batch block a static contiguous slice -> [bb,128] @ [128,HID].
    h = jnp.zeros((bb, b3_ref.shape[-1]), f32)
    for ho in range(hh):
        h = h + jnp.dot(a2[ho * bb:(ho + 1) * bb, :].astype(bf16), w3_ref[ho],
                        preferred_element_type=f32)
    h = jnp.maximum(h + b3_ref[...], 0.0).astype(bf16)

    # fc2: [bb, HID] @ [HID, 128] -> one dense 128-lane store per image row.
    logits = jnp.dot(h, w4_ref[...], preferred_element_type=f32) + b4_ref[...]
    o_ref[...] = logits.astype(o_ref.dtype)


# ----------------------------------------------------------------------------
# SeqNet: Normalize -> Conv/ReLU -> Conv/ReLU -> Flatten -> FC/ReLU -> FC
# ----------------------------------------------------------------------------
class SeqNetPallas:
    LANES = 128

    def __init__(self, key, in_ch=4, img=16, n_class=10):
        assert img % 2 == 0
        self.skip_norm = False
        self.is_double = False
        self.n_class = n_class
        self.in_ch = in_ch
        self.img = img

        c1, c2, hidden = 8, 16, 32
        self.c1, self.c2, self.hidden = c1, c2, hidden
        half = img // 2

        k = jax.random.split(key, 8)

        def u(kk, shape, fan_in):
            bound = 1.0 / jnp.sqrt(fan_in)
            return jax.random.uniform(kk, shape, jnp.float32, -bound, bound)

        # Raw parameters (same init / semantics as the per-layer PyTorch net).
        self.mean = jnp.full((in_ch,), 0.5, jnp.float32)
        self.std = jnp.full((in_ch,), 0.25, jnp.float32)
        self.w1 = u(k[0], (c1, in_ch, 3, 3), in_ch * 9)
        self.b1 = u(k[1], (c1,), in_ch * 9)
        self.w2 = u(k[2], (c2, c1, 3, 3), c1 * 9)
        self.b2 = u(k[3], (c2,), c1 * 9)
        flat = c2 * half * half
        self.w3 = u(k[4], (flat, hidden), flat)
        self.b3 = u(k[5], (hidden,), flat)
        self.w4 = u(k[6], (hidden, n_class), hidden)
        self.b4 = u(k[7], (n_class,), hidden)

        # ---- one-time packing into the fused-kernel layouts (host side) ----
        w1_np = np.asarray(self.w1, np.float32)
        std_np = np.asarray(self.std, np.float32)
        # Normalize's 1/std folds exactly into conv1 (scaling commutes with
        # zero padding); the mean subtraction is applied to x in __call__.
        band1 = self._band_conv1(w1_np / std_np[None, :, None, None],
                                 img, in_ch, c1)
        band1_raw = self._band_conv1(w1_np, img, in_ch, c1)   # skip_norm path
        self.w1cat = jnp.asarray(self._stack_conv1_taps(band1), jnp.bfloat16)
        self.w1cat_raw = jnp.asarray(self._stack_conv1_taps(band1_raw),
                                     jnp.bfloat16)
        b1t = np.tile(np.asarray(self.b1, np.float32), img)
        self.b1cat = jnp.asarray(np.concatenate([b1t, b1t])[None, :])

        band2 = self._band_conv2(np.asarray(self.w2, np.float32),
                                 img, c1, half, c2)
        # conv2: stack the (ev, od) taps along K; the shifted tap stays alone.
        self.w2a = jnp.asarray(np.concatenate([band2[1], band2[2]], axis=0),
                               jnp.bfloat16)
        self.w2s = jnp.asarray(band2[0], jnp.bfloat16)
        self.b2r = jnp.asarray(
            np.tile(np.asarray(self.b2, np.float32), half)[None, :])

        # fc1: fold PyTorch's NCHW flatten (c*HO*WO + ho*WO + wo) into a row
        # permutation/reshape of w3 -> [HO, WO*C2, hidden].
        w3_np = np.asarray(self.w3, np.float32).reshape(c2, half, half, hidden)
        self.w3r = jnp.asarray(
            np.transpose(w3_np, (1, 2, 0, 3)).reshape(half, half * c2, hidden),
            jnp.bfloat16)
        self.b3r = jnp.asarray(np.asarray(self.b3, np.float32)[None, :])

        # fc2: zero-pad N up to a full 128-lane width; wrapper slices it back.
        w4p = np.zeros((hidden, self.LANES), np.float32)
        w4p[:, :n_class] = np.asarray(self.w4, np.float32)
        b4p = np.zeros((self.LANES,), np.float32)
        b4p[:n_class] = np.asarray(self.b4, np.float32)
        self.w4p = jnp.asarray(w4p, jnp.bfloat16)
        self.b4r = jnp.asarray(b4p[None, :])

    # conv(3x3, s=1, p=1) over a [H, W*cin] row layout as 3 banded matmuls:
    #   out_row[h] = sum_kh in_row[h + kh - 1] @ band[kh]   (OOB rows are zero)
    @staticmethod
    def _band_conv1(w, W, cin, cout):
        band = np.zeros((3, W * cin, W * cout), np.float32)
        for kh in range(3):
            for wo in range(W):
                for kw in range(3):
                    iw = wo + kw - 1
                    if 0 <= iw < W:
                        band[kh, iw * cin:(iw + 1) * cin,
                             wo * cout:(wo + 1) * cout] = w[:, :, kh, kw].T
        return band

    # conv(3x3, s=2, p=1): out_row[ho] = sum_kh in_row[2*ho + kh - 1] @ band[kh]
    @staticmethod
    def _band_conv2(w, W, cin, Wo, cout):
        band = np.zeros((3, W * cin, Wo * cout), np.float32)
        for kh in range(3):
            for wo in range(Wo):
                for kw in range(3):
                    iw = 2 * wo + kw - 1
                    if 0 <= iw < W:
                        band[kh, iw * cin:(iw + 1) * cin,
                             wo * cout:(wo + 1) * cout] = w[:, :, kh, kw].T
        return band

    # Stack conv1's 3 row-taps along K for both output-row parities:
    #   even rows use taps (xe0, xo0, xe1), odd rows use (xo0, xe1, xo1).
    @staticmethod
    def _stack_conv1_taps(band):
        _, K, N = band.shape
        w = np.zeros((4 * K, 2 * N), np.float32)
        for t in range(3):
            w[t * K:(t + 1) * K, :N] = band[t]          # even conv1 rows
            w[(t + 1) * K:(t + 2) * K, N:] = band[t]    # odd  conv1 rows
        return w

    def __call__(self, x, init_lambda=False):
        B, C, H, W = x.shape
        assert (C, H, W) == (self.in_ch, self.img, self.img)
        c1, c2, hidden = self.c1, self.c2, self.hidden
        hh = self.img // 2
        lanes = self.LANES
        feat = 4 * W * C

        # Input layout transform (wrapper, plain XLA): NCHW -> lane-dense
        # [H, W*C] rows, zero-pad H, split even/odd rows, and lane-concatenate
        # the four conv1 row-tap views so the kernel's conv1 is one K-stacked
        # matmul.  Pre-cast to bf16 (half the per-step DMA bytes).
        xr = jnp.transpose(x, (0, 2, 3, 1)).astype(jnp.float32)
        if self.skip_norm:
            w1cat = self.w1cat_raw
        else:
            xr = xr - self.mean              # mean subtraction (1/std in w1cat)
            w1cat = self.w1cat
        xr = xr.reshape(B, H, W * C)
        xp = jnp.pad(xr, ((0, 0), (1, 1), (0, 0)))
        xe = xp[:, 0::2, :]                  # [B, hh+1, W*C] even padded rows
        xo = xp[:, 1::2, :]                  # [B, hh+1, W*C] odd  padded rows
        xcat = jnp.concatenate(              # [B, hh, 4*W*C]
            [xe[:, :hh], xo[:, :hh], xe[:, 1:], xo[:, 1:]], axis=-1)

        # Batch blocking: bb images per grid step (multiple of 8 so every
        # in-kernel row slice is vreg-aligned).  Small B -> one step (v5e/v6e
        # single-core); B > 8 -> >=2 steps so v7x's two TensorCores share work;
        # bb capped at 16 to keep vreg pressure in check.
        bb = 8 if B <= 16 else 16
        nb = -(-B // bb)
        b_pad = nb * bb
        if b_pad != B:
            xcat = jnp.pad(xcat, ((0, b_pad - B), (0, 0), (0, 0)))
        # Rows inside each block are ho-major / image-minor: row = ho*bb + j.
        xrows = (xcat.reshape(nb, bb, hh, feat)
                     .transpose(0, 2, 1, 3)
                     .reshape(nb * hh * bb, feat)
                     .astype(jnp.bfloat16))

        kernel = functools.partial(_seqnet_fused_kernel, hh=hh, bb=bb)
        out = pl.pallas_call(
            kernel,
            out_shape=jax.ShapeDtypeStruct((b_pad, lanes), jnp.float32),
            grid=(nb,),
            in_specs=[
                pl.BlockSpec((hh * bb, feat), lambda g: (g, 0)),
                # Weights/biases: constant index_map -> resident in VMEM
                # across grid steps (no re-DMA); ~300 KiB total so the default
                # pipelining buffers are negligible.
                pl.BlockSpec((feat, 2 * W * c1), lambda g: (0, 0)),
                pl.BlockSpec((1, 2 * W * c1), lambda g: (0, 0)),
                pl.BlockSpec((2 * W * c1, hh * c2), lambda g: (0, 0)),
                pl.BlockSpec((W * c1, hh * c2), lambda g: (0, 0)),
                pl.BlockSpec((1, hh * c2), lambda g: (0, 0)),
                pl.BlockSpec((hh, hh * c2, hidden), lambda g: (0, 0, 0)),
                pl.BlockSpec((1, hidden), lambda g: (0, 0)),
                pl.BlockSpec((hidden, lanes), lambda g: (0, 0)),
                pl.BlockSpec((1, lanes), lambda g: (0, 0)),
            ],
            out_specs=pl.BlockSpec((bb, lanes), lambda g: (g, 0)),
            compiler_params=pltpu.CompilerParams(
                dimension_semantics=("parallel",)),
        )(xrows, w1cat, self.b1cat, self.w2a, self.w2s, self.b2r,
          self.w3r, self.b3r, self.w4p, self.b4r)
        return out[:B, :self.n_class]

    # Pure-JAX (XLA) reference with exact PyTorch semantics, for validation.
    def reference(self, x):
        if self.skip_norm:
            xn = x
        else:
            xn = (x - self.mean[None, :, None, None]) / self.std[None, :, None, None]
        y = jax.lax.conv_general_dilated(
            xn, self.w1, (1, 1), ((1, 1), (1, 1)),
            dimension_numbers=("NCHW", "OIHW", "NCHW"))
        y = jax.nn.relu(y + self.b1[None, :, None, None])
        y = jax.lax.conv_general_dilated(
            y, self.w2, (2, 2), ((1, 1), (1, 1)),
            dimension_numbers=("NCHW", "OIHW", "NCHW"))
        y = jax.nn.relu(y + self.b2[None, :, None, None])
        y = y.reshape(y.shape[0], -1)
        y = jax.nn.relu(y @ self.w3 + self.b3)
        return y @ self.w4 + self.b4


if __name__ == "__main__":
    key = jax.random.PRNGKey(0)
    k_param, k_x = jax.random.split(key)
    net = SeqNetPallas(k_param, in_ch=4, img=16, n_class=10)

    x = jax.random.uniform(k_x, (2, 4, 16, 16), jnp.float32)   # NCHW like PyTorch
    fwd = jax.jit(net.__call__)
    out = jax.block_until_ready(fwd(x))
    assert out.shape == (2, 10), out.shape
    assert bool(jnp.all(jnp.isfinite(out)))

    # Validate the fused kernel (normalize fold, K-stacked conv taps, in-register
    # shift, flatten permutation) against a pure-XLA f32 reference; loose tol
    # for bf16 MXU operands.
    ref = jax.block_until_ready(net.reference(x))
    err = float(jnp.max(jnp.abs(out - ref)))
    assert err < 0.15, f"fused kernel mismatch vs reference: max|diff|={err}"
    print("KERNEL_OK")
</pallas_src>

<mosaic_0001>
module attributes {stable_mosaic.version = 11 : i64} {
  func.func @_seqnet_fused_kernel(%arg0: i32, %arg1: memref<64x256xbf16, #tpu.memory_space<vmem>>, %arg2: memref<256x256xbf16, #tpu.memory_space<vmem>>, %arg3: memref<1x256xf32, #tpu.memory_space<vmem>>, %arg4: memref<256x128xbf16, #tpu.memory_space<vmem>>, %arg5: memref<128x128xbf16, #tpu.memory_space<vmem>>, %arg6: memref<1x128xf32, #tpu.memory_space<vmem>>, %arg7: memref<8x128x32xbf16, #tpu.memory_space<vmem>>, %arg8: memref<1x32xf32, #tpu.memory_space<vmem>>, %arg9: memref<32x128xbf16, #tpu.memory_space<vmem>>, %arg10: memref<1x128xf32, #tpu.memory_space<vmem>>, %arg11: memref<8x128xf32, #tpu.memory_space<vmem>>) attributes {dimension_semantics = [#tpu.dimension_semantics<parallel>], iteration_bounds = array<i64: 1>, scalar_prefetch = 0 : i64, scratch_operands = 0 : i64, tpu.core_type = #tpu.core_type<tc>, window_params = [{transform_indices = @transform_0, window_bounds = array<i64: 64, 256>}, {pipeline_mode = #tpu.pipeline_mode<synchronous>, transform_indices = @transform_1, window_bounds = array<i64: 256, 256>}, {pipeline_mode = #tpu.pipeline_mode<synchronous>, transform_indices = @transform_2, window_bounds = array<i64: 1, 256>}, {pipeline_mode = #tpu.pipeline_mode<synchronous>, transform_indices = @transform_3, window_bounds = array<i64: 256, 128>}, {pipeline_mode = #tpu.pipeline_mode<synchronous>, transform_indices = @transform_4, window_bounds = array<i64: 128, 128>}, {pipeline_mode = #tpu.pipeline_mode<synchronous>, transform_indices = @transform_5, window_bounds = array<i64: 1, 128>}, {pipeline_mode = #tpu.pipeline_mode<synchronous>, transform_indices = @transform_6, window_bounds = array<i64: 8, 128, 32>}, {pipeline_mode = #tpu.pipeline_mode<synchronous>, transform_indices = @transform_7, window_bounds = array<i64: 1, 32>}, {pipeline_mode = #tpu.pipeline_mode<synchronous>, transform_indices = @transform_8, window_bounds = array<i64: 32, 128>}, {pipeline_mode = #tpu.pipeline_mode<synchronous>, transform_indices = @transform_9, window_bounds = array<i64: 1, 128>}, {transform_indices = @transform_10, window_bounds = array<i64: 8, 128>}]} {
    %c0 = arith.constant 0 : index
    %c0_0 = arith.constant 0 : index
    %0 = vector.load %arg1[%c0, %c0_0] : memref<64x256xbf16, #tpu.memory_space<vmem>>, vector<64x256xbf16>
    %c0_1 = arith.constant 0 : index
    %c0_2 = arith.constant 0 : index
    %1 = vector.load %arg2[%c0_1, %c0_2] : memref<256x256xbf16, #tpu.memory_space<vmem>>, vector<256x256xbf16>
    %cst = arith.constant dense<0.000000e+00> : vector<64x256xf32>
    %2 = tpu.matmul %0, %1, %cst {dimension_numbers = #tpu.dot_dimension_numbers<[1], [0], [0], [1], [0, 0, 1, 1], [], []>} : vector<64x256xbf16>, vector<256x256xbf16>, vector<64x256xf32> -> vector<64x256xf32>
    %c0_3 = arith.constant 0 : index
    %c0_4 = arith.constant 0 : index
    %3 = vector.load %arg3[%c0_3, %c0_4] : memref<1x256xf32, #tpu.memory_space<vmem>>, vector<1x256xf32>
    %4 = vector.broadcast %3 : vector<1x256xf32> to vector<64x256xf32>
    %5 = arith.addf %2, %4 : vector<64x256xf32>
    %cst_5 = arith.constant 0.000000e+00 : f32
    %6 = vector.broadcast %cst_5 : f32 to vector<64x256xf32>
    %7 = arith.maximumf %5, %6 : vector<64x256xf32>
    %8 = vector.extract_strided_slice %7 {offsets = [0, 128], sizes = [64, 128], strides = [1, 1]} : vector<64x256xf32> to vector<64x128xf32>
    %cst_6 = arith.constant 0.000000e+00 : f32
    %9 = vector.broadcast %cst_6 : f32 to vector<8x128xf32>
    %10 = vector.extract_strided_slice %8 {offsets = [0, 0], sizes = [56, 128], strides = [1, 1]} : vector<64x128xf32> to vector<56x128xf32>
    %11 = tpu.concatenate %9, %10 in 0 : vector<8x128xf32>, vector<56x128xf32> -> vector<64x128xf32>
    %12 = arith.truncf %11 : vector<64x128xf32> to vector<64x128xbf16>
    %13 = arith.truncf %7 : vector<64x256xf32> to vector<64x256xbf16>
    %c0_7 = arith.constant 0 : index
    %c0_8 = arith.constant 0 : index
    %14 = vector.load %arg4[%c0_7, %c0_8] : memref<256x128xbf16, #tpu.memory_space<vmem>>, vector<256x128xbf16>
    %cst_9 = arith.constant dense<0.000000e+00> : vector<64x128xf32>
    %15 = tpu.matmul %13, %14, %cst_9 {dimension_numbers = #tpu.dot_dimension_numbers<[1], [0], [0], [1], [0, 0, 1, 1], [], []>} : vector<64x256xbf16>, vector<256x128xbf16>, vector<64x128xf32> -> vector<64x128xf32>
    %c0_10 = arith.constant 0 : index
    %c0_11 = arith.constant 0 : index
    %16 = vector.load %arg5[%c0_10, %c0_11] : memref<128x128xbf16, #tpu.memory_space<vmem>>, vector<128x128xbf16>
    %cst_12 = arith.constant dense<0.000000e+00> : vector<64x128xf32>
    %17 = tpu.matmul %12, %16, %cst_12 {dimension_numbers = #tpu.dot_dimension_numbers<[1], [0], [0], [1], [0, 0, 1, 1], [], []>} : vector<64x128xbf16>, vector<128x128xbf16>, vector<64x128xf32> -> vector<64x128xf32>
    %18 = arith.addf %15, %17 : vector<64x128xf32>
    %c0_13 = arith.constant 0 : index
    %c0_14 = arith.constant 0 : index
    %19 = vector.load %arg6[%c0_13, %c0_14] : memref<1x128xf32, #tpu.memory_space<vmem>>, vector<1x128xf32>
    %20 = vector.broadcast %19 : vector<1x128xf32> to vector<64x128xf32>
    %21 = arith.addf %18, %20 : vector<64x128xf32>
    %cst_15 = arith.constant 0.000000e+00 : f32
    %22 = vector.broadcast %cst_15 : f32 to vector<64x128xf32>
    %23 = arith.maximumf %21, %22 : vector<64x128xf32>
    %cst_16 = arith.constant 0.000000e+00 : f32
    %24 = vector.broadcast %cst_16 : f32 to vector<8x32xf32>
    %25 = vector.extract_strided_slice %23 {offsets = [0, 0], sizes = [8, 128], strides = [1, 1]} : vector<64x128xf32> to vector<8x128xf32>
    %26 = arith.truncf %25 : vector<8x128xf32> to vector<8x128xbf16>
    %c0_17 = arith.constant 0 : index
    %c0_18 = arith.constant 0 : index
    %c0_19 = arith.constant 0 : index
    %27 = vector.load %arg7[%c0_17, %c0_18, %c0_19] : memref<8x128x32xbf16, #tpu.memory_space<vmem>>, vector<1x128x32xbf16>
    %28 = vector.shape_cast %27 : vector<1x128x32xbf16> to vector<128x32xbf16>
    %cst_20 = arith.constant dense<0.000000e+00> : vector<8x32xf32>
    %29 = tpu.matmul %26, %28, %cst_20 {dimension_numbers = #tpu.dot_dimension_numbers<[1], [0], [0], [1], [0, 0, 1, 1], [], []>} : vector<8x128xbf16>, vector<128x32xbf16>, vector<8x32xf32> -> vector<8x32xf32>
    %30 = arith.addf %24, %29 : vector<8x32xf32>
    %31 = vector.extract_strided_slice %23 {offsets = [8, 0], sizes = [8, 128], strides = [1, 1]} : vector<64x128xf32> to vector<8x128xf32>
    %32 = arith.truncf %31 : vector<8x128xf32> to vector<8x128xbf16>
    %c1 = arith.constant 1 : index
    %c0_21 = arith.constant 0 : index
    %c0_22 = arith.constant 0 : index
    %33 = vector.load %arg7[%c1, %c0_21, %c0_22] : memref<8x128x32xbf16, #tpu.memory_space<vmem>>, vector<1x128x32xbf16>
    %34 = vector.shape_cast %33 : vector<1x128x32xbf16> to vector<128x32xbf16>
    %cst_23 = arith.constant dense<0.000000e+00> : vector<8x32xf32>
    %35 = tpu.matmul %32, %34, %cst_23 {dimension_numbers = #tpu.dot_dimension_numbers<[1], [0], [0], [1], [0, 0, 1, 1], [], []>} : vector<8x128xbf16>, vector<128x32xbf16>, vector<8x32xf32> -> vector<8x32xf32>
    %36 = arith.addf %30, %35 : vector<8x32xf32>
    %37 = vector.extract_strided_slice %23 {offsets = [16, 0], sizes = [8, 128], strides = [1, 1]} : vector<64x128xf32> to vector<8x128xf32>
    %38 = arith.truncf %37 : vector<8x128xf32> to vector<8x128xbf16>
    %c2 = arith.constant 2 : index
    %c0_24 = arith.constant 0 : index
    %c0_25 = arith.constant 0 : index
    %39 = vector.load %arg7[%c2, %c0_24, %c0_25] : memref<8x128x32xbf16, #tpu.memory_space<vmem>>, vector<1x128x32xbf16>
    %40 = vector.shape_cast %39 : vector<1x128x32xbf16> to vector<128x32xbf16>
    %cst_26 = arith.constant dense<0.000000e+00> : vector<8x32xf32>
    %41 = tpu.matmul %38, %40, %cst_26 {dimension_numbers = #tpu.dot_dimension_numbers<[1], [0], [0], [1], [0, 0, 1, 1], [], []>} : vector<8x128xbf16>, vector<128x32xbf16>, vector<8x32xf32> -> vector<8x32xf32>
    %42 = arith.addf %36, %41 : vector<8x32xf32>
    %43 = vector.extract_strided_slice %23 {offsets = [24, 0], sizes = [8, 128], strides = [1, 1]} : vector<64x128xf32> to vector<8x128xf32>
    %44 = arith.truncf %43 : vector<8x128xf32> to vector<8x128xbf16>
    %c3 = arith.constant 3 : index
    %c0_27 = arith.constant 0 : index
    %c0_28 = arith.constant 0 : index
    %45 = vector.load %arg7[%c3, %c0_27, %c0_28] : memref<8x128x32xbf16, #tpu.memory_space<vmem>>, vector<1x128x32xbf16>
    %46 = vector.shape_cast %45 : vector<1x128x32xbf16> to vector<128x32xbf16>
    %cst_29 = arith.constant dense<0.000000e+00> : vector<8x32xf32>
    %47 = tpu.matmul %44, %46, %cst_29 {dimension_numbers = #tpu.dot_dimension_numbers<[1], [0], [0], [1], [0, 0, 1, 1], [], []>} : vector<8x128xbf16>, vector<128x32xbf16>, vector<8x32xf32> -> vector<8x32xf32>
    %48 = arith.addf %42, %47 : vector<8x32xf32>
    %49 = vector.extract_strided_slice %23 {offsets = [32, 0], sizes = [8, 128], strides = [1, 1]} : vector<64x128xf32> to vector<8x128xf32>
    %50 = arith.truncf %49 : vector<8x128xf32> to vector<8x128xbf16>
    %c4 = arith.constant 4 : index
    %c0_30 = arith.constant 0 : index
    %c0_31 = arith.constant 0 : index
    %51 = vector.load %arg7[%c4, %c0_30, %c0_31] : memref<8x128x32xbf16, #tpu.memory_space<vmem>>, vector<1x128x32xbf16>
    %52 = vector.shape_cast %51 : vector<1x128x32xbf16> to vector<128x32xbf16>
    %cst_32 = arith.constant dense<0.000000e+00> : vector<8x32xf32>
    %53 = tpu.matmul %50, %52, %cst_32 {dimension_numbers = #tpu.dot_dimension_numbers<[1], [0], [0], [1], [0, 0, 1, 1], [], []>} : vector<8x128xbf16>, vector<128x32xbf16>, vector<8x32xf32> -> vector<8x32xf32>
    %54 = arith.addf %48, %53 : vector<8x32xf32>
    %55 = vector.extract_strided_slice %23 {offsets = [40, 0], sizes = [8, 128], strides = [1, 1]} : vector<64x128xf32> to vector<8x128xf32>
    %56 = arith.truncf %55 : vector<8x128xf32> to vector<8x128xbf16>
    %c5 = arith.constant 5 : index
    %c0_33 = arith.constant 0 : index
    %c0_34 = arith.constant 0 : index
    %57 = vector.load %arg7[%c5, %c0_33, %c0_34] : memref<8x128x32xbf16, #tpu.memory_space<vmem>>, vector<1x128x32xbf16>
    %58 = vector.shape_cast %57 : vector<1x128x32xbf16> to vector<128x32xbf16>
    %cst_35 = arith.constant dense<0.000000e+00> : vector<8x32xf32>
    %59 = tpu.matmul %56, %58, %cst_35 {dimension_numbers = #tpu.dot_dimension_numbers<[1], [0], [0], [1], [0, 0, 1, 1], [], []>} : vector<8x128xbf16>, vector<128x32xbf16>, vector<8x32xf32> -> vector<8x32xf32>
    %60 = arith.addf %54, %59 : vector<8x32xf32>
    %61 = vector.extract_strided_slice %23 {offsets = [48, 0], sizes = [8, 128], strides = [1, 1]} : vector<64x128xf32> to vector<8x128xf32>
    %62 = arith.truncf %61 : vector<8x128xf32> to vector<8x128xbf16>
    %c6 = arith.constant 6 : index
    %c0_36 = arith.constant 0 : index
    %c0_37 = arith.constant 0 : index
    %63 = vector.load %arg7[%c6, %c0_36, %c0_37] : memref<8x128x32xbf16, #tpu.memory_space<vmem>>, vector<1x128x32xbf16>
    %64 = vector.shape_cast %63 : vector<1x128x32xbf16> to vector<128x32xbf16>
    %cst_38 = arith.constant dense<0.000000e+00> : vector<8x32xf32>
    %65 = tpu.matmul %62, %64, %cst_38 {dimension_numbers = #tpu.dot_dimension_numbers<[1], [0], [0], [1], [0, 0, 1, 1], [], []>} : vector<8x128xbf16>, vector<128x32xbf16>, vector<8x32xf32> -> vector<8x32xf32>
    %66 = arith.addf %60, %65 : vector<8x32xf32>
    %67 = vector.extract_strided_slice %23 {offsets = [56, 0], sizes = [8, 128], strides = [1, 1]} : vector<64x128xf32> to vector<8x128xf32>
    %68 = arith.truncf %67 : vector<8x128xf32> to vector<8x128xbf16>
    %c7 = arith.constant 7 : index
    %c0_39 = arith.constant 0 : index
    %c0_40 = arith.constant 0 : index
    %69 = vector.load %arg7[%c7, %c0_39, %c0_40] : memref<8x128x32xbf16, #tpu.memory_space<vmem>>, vector<1x128x32xbf16>
    %70 = vector.shape_cast %69 : vector<1x128x32xbf16> to vector<128x32xbf16>
    %cst_41 = arith.constant dense<0.000000e+00> : vector<8x32xf32>
    %71 = tpu.matmul %68, %70, %cst_41 {dimension_numbers = #tpu.dot_dimension_numbers<[1], [0], [0], [1], [0, 0, 1, 1], [], []>} : vector<8x128xbf16>, vector<128x32xbf16>, vector<8x32xf32> -> vector<8x32xf32>
    %72 = arith.addf %66, %71 : vector<8x32xf32>
    %c0_42 = arith.constant 0 : index
    %c0_43 = arith.constant 0 : index
    %73 = vector.load %arg8[%c0_42, %c0_43] : memref<1x32xf32, #tpu.memory_space<vmem>>, vector<1x32xf32>
    %74 = vector.broadcast %73 : vector<1x32xf32> to vector<8x32xf32>
    %75 = arith.addf %72, %74 : vector<8x32xf32>
    %cst_44 = arith.constant 0.000000e+00 : f32
    %76 = vector.broadcast %cst_44 : f32 to vector<8x32xf32>
    %77 = arith.maximumf %75, %76 : vector<8x32xf32>
    %78 = arith.truncf %77 : vector<8x32xf32> to vector<8x32xbf16>
    %c0_45 = arith.constant 0 : index
    %c0_46 = arith.constant 0 : index
    %79 = vector.load %arg9[%c0_45, %c0_46] : memref<32x128xbf16, #tpu.memory_space<vmem>>, vector<32x128xbf16>
    %cst_47 = arith.constant dense<0.000000e+00> : vector<8x128xf32>
    %80 = tpu.matmul %78, %79, %cst_47 {dimension_numbers = #tpu.dot_dimension_numbers<[1], [0], [0], [1], [0, 0, 1, 1], [], []>} : vector<8x32xbf16>, vector<32x128xbf16>, vector<8x128xf32> -> vector<8x128xf32>
    %c0_48 = arith.constant 0 : index
    %c0_49 = arith.constant 0 : index
    %81 = vector.load %arg10[%c0_48, %c0_49] : memref<1x128xf32, #tpu.memory_space<vmem>>, vector<1x128xf32>
    %82 = vector.broadcast %81 : vector<1x128xf32> to vector<8x128xf32>
    %83 = arith.addf %80, %82 : vector<8x128xf32>
    %c0_50 = arith.constant 0 : index
    %c0_51 = arith.constant 0 : index
    %84 = vector.load %arg11[%c0_50, %c0_51] : memref<8x128xf32, #tpu.memory_space<vmem>>, vector<8x128xf32>
    tpu.vector_store %arg11[%c0_50, %c0_51], %83 {strides = array<i32>} : memref<8x128xf32, #tpu.memory_space<vmem>>, vector<8x128xf32>,
    return
  }
  func.func @transform_0(%arg0: i32) -> (i32, i32) {
    %c0_i32 = arith.constant 0 : i32
    %c0_i32_0 = arith.constant 0 : i32
    return %arg0, %c0_i32 : i32, i32
  }
  func.func @transform_1(%arg0: i32) -> (i32, i32) {
    %c0_i32 = arith.constant 0 : i32
    %c0_i32_0 = arith.constant 0 : i32
    %c0_i32_1 = arith.constant 0 : i32
    return %c0_i32, %c0_i32_0 : i32, i32
  }
  func.func @transform_2(%arg0: i32) -> (i32, i32) {
    %c0_i32 = arith.constant 0 : i32
    %c0_i32_0 = arith.constant 0 : i32
    %c0_i32_1 = arith.constant 0 : i32
    return %c0_i32, %c0_i32_0 : i32, i32
  }
  func.func @transform_3(%arg0: i32) -> (i32, i32) {
    %c0_i32 = arith.constant 0 : i32
    %c0_i32_0 = arith.constant 0 : i32
    %c0_i32_1 = arith.constant 0 : i32
    return %c0_i32, %c0_i32_0 : i32, i32
  }
  func.func @transform_4(%arg0: i32) -> (i32, i32) {
    %c0_i32 = arith.constant 0 : i32
    %c0_i32_0 = arith.constant 0 : i32
    %c0_i32_1 = arith.constant 0 : i32
    return %c0_i32, %c0_i32_0 : i32, i32
  }
  func.func @transform_5(%arg0: i32) -> (i32, i32) {
    %c0_i32 = arith.constant 0 : i32
    %c0_i32_0 = arith.constant 0 : i32
    %c0_i32_1 = arith.constant 0 : i32
    return %c0_i32, %c0_i32_0 : i32, i32
  }
  func.func @transform_6(%arg0: i32) -> (i32, i32, i32) {
    %c0_i32 = arith.constant 0 : i32
    %c0_i32_0 = arith.constant 0 : i32
    %c0_i32_1 = arith.constant 0 : i32
    %c0_i32_2 = arith.constant 0 : i32
    return %c0_i32, %c0_i32_0, %c0_i32_1 : i32, i32, i32
  }
  func.func @transform_7(%arg0: i32) -> (i32, i32) {
    %c0_i32 = arith.constant 0 : i32
    %c0_i32_0 = arith.constant 0 : i32
    %c0_i32_1 = arith.constant 0 : i32
    return %c0_i32, %c0_i32_0 : i32, i32
  }
  func.func @transform_8(%arg0: i32) -> (i32, i32) {
    %c0_i32 = arith.constant 0 : i32
    %c0_i32_0 = arith.constant 0 : i32
    %c0_i32_1 = arith.constant 0 : i32
    return %c0_i32, %c0_i32_0 : i32, i32
  }
  func.func @transform_9(%arg0: i32) -> (i32, i32) {
    %c0_i32 = arith.constant 0 : i32
    %c0_i32_0 = arith.constant 0 : i32
    %c0_i32_1 = arith.constant 0 : i32
    return %c0_i32, %c0_i32_0 : i32, i32
  }
  func.func @transform_10(%arg0: i32) -> (i32, i32) {
    %c0_i32 = arith.constant 0 : i32
    %c0_i32_0 = arith.constant 0 : i32
    return %arg0, %c0_i32 : i32, i32
  }
}

</mosaic_0001>

<llo_original>
// kernel: a_call__.1
$region0: #{a_call__.1}
  #allocation0 [shape = 'u32[]', space=smem, size = 0x4, offset = 0x4, fixed_abs, tag = 'smem constant byte address 0x4 - core index']
  #allocation1 [shape = 'u32[72,128]{1,0:T(1,128)}', space=vmem, size = 0x9000, scoped, tag = 'internal scratch']
  %s0 = inlined_call_operand.vmem [shape: bf16[64,256], index: 0, kind: input, shape index: {}]
  %s1 = inlined_call_operand.vmem [shape: bf16[256,256], index: 1, kind: input, shape index: {}]
  %s2 = inlined_call_operand.vmem [shape: f32[1,256], index: 2, kind: input, shape index: {}]
  %s3 = inlined_call_operand.vmem [shape: bf16[256,128], index: 3, kind: input, shape index: {}]
  %s4 = inlined_call_operand.vmem [shape: bf16[128,128], index: 4, kind: input, shape index: {}]
  %s5 = inlined_call_operand.vmem [shape: f32[1,128], index: 5, kind: input, shape index: {}]
  %s6 = inlined_call_operand.vmem [shape: bf16[8,128,32], index: 6, kind: input, shape index: {}]
  %s7 = inlined_call_operand.vmem [shape: f32[1,32], index: 7, kind: input, shape index: {}]
  %s8 = inlined_call_operand.vmem [shape: bf16[32,128], index: 8, kind: input, shape index: {}]
  %s9 = inlined_call_operand.vmem [shape: f32[1,128], index: 9, kind: input, shape index: {}]
  %s10 = inlined_call_operand.vmem [shape: f32[8,128], index: 10, kind: output, shape index: {}]
  %s11 = sld [smem:[#allocation0]]
  $region50: #{a_call__.1} parent=0
    _
  %s13 = ssub.s32 1, %s11
  %s14 = scalar_select 0, %s13, %s11
  // Predicated region
  $region2: #{a_call__.1} parent=0 // pred_check
    _
  $region3: #{a_call__.1} parent=0 // pred_check_branch
    %16 = sbr.rel (0) target = $region5
  $region4: #{a_call__.1} parent=0 // pred_region
    _
  $region5: #{a_call__.1} parent=0 // pred_fallthru
    _
  // Predicated region
  $region6: #{a_call__.1} parent=0 // pred_check
    _
  $region7: #{a_call__.1} parent=0 // pred_check_branch
    %18 = sbr.rel (0) target = $region9
  $region8: #{a_call__.1} parent=0 // pred_region
    _
  $region9: #{a_call__.1} parent=0 // pred_fallthru
    _
  // Predicated region
  $region10: #{a_call__.1} parent=0 // pred_check
    _
  $region11: #{a_call__.1} parent=0 // pred_check_branch
    %20 = sbr.rel (0) target = $region13
  $region12: #{a_call__.1} parent=0 // pred_region
    _
  $region13: #{a_call__.1} parent=0 // pred_fallthru
    _
  // Predicated region
  $region14: #{a_call__.1} parent=0 // pred_check
    _
  $region15: #{a_call__.1} parent=0 // pred_check_branch
    %22 = sbr.rel (0) target = $region17
  $region16: #{a_call__.1} parent=0 // pred_region
    _
  $region17: #{a_call__.1} parent=0 // pred_fallthru
    _
  // Predicated region
  $region18: #{a_call__.1} parent=0 // pred_check
    _
  $region19: #{a_call__.1} parent=0 // pred_check_branch
    %24 = sbr.rel (0) target = $region21
  $region20: #{a_call__.1} parent=0 // pred_region
    _
  $region21: #{a_call__.1} parent=0 // pred_fallthru
    _
  // Predicated region
  $region22: #{a_call__.1} parent=0 // pred_check
    _
  $region23: #{a_call__.1} parent=0 // pred_check_branch
    %26 = sbr.rel (0) target = $region25
  $region24: #{a_call__.1} parent=0 // pred_region
    _
  $region25: #{a_call__.1} parent=0 // pred_fallthru
    _
  // Predicated region
  $region26: #{a_call__.1} parent=0 // pred_check
    _
  $region27: #{a_call__.1} parent=0 // pred_check_branch
    %28 = sbr.rel (0) target = $region29
  $region28: #{a_call__.1} parent=0 // pred_region
    _
  $region29: #{a_call__.1} parent=0 // pred_fallthru
    _
  // Predicated region
  $region30: #{a_call__.1} parent=0 // pred_check
    _
  $region31: #{a_call__.1} parent=0 // pred_check_branch
    %30 = sbr.rel (0) target = $region33
  $region32: #{a_call__.1} parent=0 // pred_region
    _
  $region33: #{a_call__.1} parent=0 // pred_fallthru
    _
  // Predicated region
  $region34: #{a_call__.1} parent=0 // pred_check
    _
  $region35: #{a_call__.1} parent=0 // pred_check_branch
    %32 = sbr.rel (0) target = $region37
  $region36: #{a_call__.1} parent=0 // pred_region
    _
  $region37: #{a_call__.1} parent=0 // pred_fallthru
    _
  // Predicated region
  $region38: #{a_call__.1} parent=0 // pred_check
    _
  $region39: #{a_call__.1} parent=0 // pred_check_branch
    %34 = sbr.rel (0) target = $region41
  $region40: #{a_call__.1} parent=0 // pred_region
    _
  $region41: #{a_call__.1} parent=0 // pred_fallthru
    _
  %v36 = vld [vmem:[%s0] sm:$0xff]
  %v37 = vld [vmem:[%s0 + $0x8] sm:$0xff]
  %v38 = vld [vmem:[%s0 + $0x10] sm:$0xff]
  %v39 = vld [vmem:[%s0 + $0x18] sm:$0xff]
  %v40 = vld [vmem:[%s0 + $0x20] sm:$0xff]
  %v41 = vld [vmem:[%s0 + $0x28] sm:$0xff]
  %v42 = vld [vmem:[%s0 + $0x30] sm:$0xff]
  %v43 = vld [vmem:[%s0 + $0x38] sm:$0xff]
  %v44 = vld [vmem:[%s1] sm:$0xff]
  %v45 = vld [vmem:[%s1 + $0x8] sm:$0xff]
  %v46 = vld [vmem:[%s1 + $0x10] sm:$0xff]
  %v47 = vld [vmem:[%s1 + $0x18] sm:$0xff]
  %v48 = vld [vmem:[%s1 + $0x20] sm:$0xff]
  %v49 = vld [vmem:[%s1 + $0x28] sm:$0xff]
  %v50 = vld [vmem:[%s1 + $0x30] sm:$0xff]
  %v51 = vld [vmem:[%s1 + $0x38] sm:$0xff]
  %v52 = vld [vmem:[%s1 + $0x40] sm:$0xff]
  %v53 = vld [vmem:[%s1 + $0x48] sm:$0xff]
  %v54 = vld [vmem:[%s1 + $0x50] sm:$0xff]
  %v55 = vld [vmem:[%s1 + $0x58] sm:$0xff]
  %v56 = vld [vmem:[%s1 + $0x60] sm:$0xff]
  %v57 = vld [vmem:[%s1 + $0x68] sm:$0xff]
  %v58 = vld [vmem:[%s1 + $0x70] sm:$0xff]
  %v59 = vld [vmem:[%s1 + $0x78] sm:$0xff]
  %v60 = vld [vmem:[%s1 + $0x80] sm:$0xff]
  %v61 = vld [vmem:[%s1 + $0x88] sm:$0xff]
  %v62 = vld [vmem:[%s1 + $0x90] sm:$0xff]
  %v63 = vld [vmem:[%s1 + $0x98] sm:$0xff]
  %v64 = vld [vmem:[%s1 + $0xa0] sm:$0xff]
  %v65 = vld [vmem:[%s1 + $0xa8] sm:$0xff]
  %v66 = vld [vmem:[%s1 + $0xb0] sm:$0xff]
  %v67 = vld [vmem:[%s1 + $0xb8] sm:$0xff]
  %v68 = vld [vmem:[%s1 + $0xc0] sm:$0xff]
  %v69 = vld [vmem:[%s1 + $0xc8] sm:$0xff]
  %v70 = vld [vmem:[%s1 + $0xd0] sm:$0xff]
  %v71 = vld [vmem:[%s1 + $0xd8] sm:$0xff]
  %v72 = vld [vmem:[%s1 + $0xe0] sm:$0xff]
  %v73 = vld [vmem:[%s1 + $0xe8] sm:$0xff]
  %v74 = vld [vmem:[%s1 + $0xf0] sm:$0xff]
  %v75 = vld [vmem:[%s1 + $0xf8] sm:$0xff]
  %v76 = vld [vmem:[%s2] sm:$0x3]
  %v78 = vperm.slane %v76, 0
  %v79 = vperm.slane %v76, 1
  %v90 = vunpack.c.l.b16 %v36
  %v91 = vunpack.c.h.b16 %v36
  %v92 = vunpack.c.l.b16 %v37
  %v93 = vunpack.c.h.b16 %v37
  %v94 = vunpack.c.l.b16 %v38
  %v95 = vunpack.c.h.b16 %v38
  %v96 = vunpack.c.l.b16 %v39
  %v97 = vunpack.c.h.b16 %v39
  %v98 = vunpack.c.l.b16 %v40
  %v99 = vunpack.c.h.b16 %v40
  %v100 = vunpack.c.l.b16 %v41
  %v101 = vunpack.c.h.b16 %v41
  %v102 = vunpack.c.l.b16 %v42
  %v103 = vunpack.c.h.b16 %v42
  %v104 = vunpack.c.l.b16 %v43
  %v105 = vunpack.c.h.b16 %v43
  %v106 = vpack.c.b16 %v92, %v90
  %v107 = vpack.c.b16 %v93, %v91
  %v108 = vpack.c.b16 %v96, %v94
  %v109 = vpack.c.b16 %v97, %v95
  %v110 = vpack.c.b16 %v100, %v98
  %v111 = vpack.c.b16 %v101, %v99
  %v112 = vpack.c.b16 %v104, %v102
  %v113 = vpack.c.b16 %v105, %v103
  %v154 = vunpack.c.l.b16 %v44
  %v155 = vunpack.c.h.b16 %v44
  %v156 = vunpack.c.l.b16 %v45
  %v157 = vunpack.c.h.b16 %v45
  %v158 = vunpack.c.l.b16 %v46
  %v159 = vunpack.c.h.b16 %v46
  %v160 = vunpack.c.l.b16 %v47
  %v161 = vunpack.c.h.b16 %v47
  %v162 = vunpack.c.l.b16 %v48
  %v163 = vunpack.c.h.b16 %v48
  %v164 = vunpack.c.l.b16 %v49
  %v165 = vunpack.c.h.b16 %v49
  %v166 = vunpack.c.l.b16 %v50
  %v167 = vunpack.c.h.b16 %v50
  %v168 = vunpack.c.l.b16 %v51
  %v169 = vunpack.c.h.b16 %v51
  %v170 = vunpack.c.l.b16 %v52
  %v171 = vunpack.c.h.b16 %v52
  %v172 = vunpack.c.l.b16 %v53
  %v173 = vunpack.c.h.b16 %v53
  %v174 = vunpack.c.l.b16 %v54
  %v175 = vunpack.c.h.b16 %v54
  %v176 = vunpack.c.l.b16 %v55
  %v177 = vunpack.c.h.b16 %v55
  %v178 = vunpack.c.l.b16 %v56
  %v179 = vunpack.c.h.b16 %v56
  %v180 = vunpack.c.l.b16 %v57
  %v181 = vunpack.c.h.b16 %v57
  %v182 = vunpack.c.l.b16 %v58
  %v183 = vunpack.c.h.b16 %v58
  %v184 = vunpack.c.l.b16 %v59
  %v185 = vunpack.c.h.b16 %v59
  %v186 = vunpack.c.l.b16 %v60
  %v187 = vunpack.c.h.b16 %v60
  %v188 = vunpack.c.l.b16 %v61
  %v189 = vunpack.c.h.b16 %v61
  %v190 = vunpack.c.l.b16 %v62
  %v191 = vunpack.c.h.b16 %v62
  %v192 = vunpack.c.l.b16 %v63
  %v193 = vunpack.c.h.b16 %v63
  %v194 = vunpack.c.l.b16 %v64
  %v195 = vunpack.c.h.b16 %v64
  %v196 = vunpack.c.l.b16 %v65
  %v197 = vunpack.c.h.b16 %v65
  %v198 = vunpack.c.l.b16 %v66
  %v199 = vunpack.c.h.b16 %v66
  %v200 = vunpack.c.l.b16 %v67
  %v201 = vunpack.c.h.b16 %v67
  %v202 = vunpack.c.l.b16 %v68
  %v203 = vunpack.c.h.b16 %v68
  %v204 = vunpack.c.l.b16 %v69
  %v205 = vunpack.c.h.b16 %v69
  %v206 = vunpack.c.l.b16 %v70
  %v207 = vunpack.c.h.b16 %v70
  %v208 = vunpack.c.l.b16 %v71
  %v209 = vunpack.c.h.b16 %v71
  %v210 = vunpack.c.l.b16 %v72
  %v211 = vunpack.c.h.b16 %v72
  %v212 = vunpack.c.l.b16 %v73
  %v213 = vunpack.c.h.b16 %v73
  %v214 = vunpack.c.l.b16 %v74
  %v215 = vunpack.c.h.b16 %v74
  %v216 = vunpack.c.l.b16 %v75
  %v217 = vunpack.c.h.b16 %v75
  %v218 = vpack.c.b16 %v156, %v154
  %v219 = vpack.c.b16 %v157, %v155
  %v220 = vpack.c.b16 %v160, %v158
  %v221 = vpack.c.b16 %v161, %v159
  %v222 = vpack.c.b16 %v164, %v162
  %v223 = vpack.c.b16 %v165, %v163
  %v224 = vpack.c.b16 %v168, %v166
  %v225 = vpack.c.b16 %v169, %v167
  %v226 = vpack.c.b16 %v172, %v170
  %v227 = vpack.c.b16 %v173, %v171
  %v228 = vpack.c.b16 %v176, %v174
  %v229 = vpack.c.b16 %v177, %v175
  %v230 = vpack.c.b16 %v180, %v178
  %v231 = vpack.c.b16 %v181, %v179
  %v232 = vpack.c.b16 %v184, %v182
  %v233 = vpack.c.b16 %v185, %v183
  %v234 = vpack.c.b16 %v188, %v186
  %v235 = vpack.c.b16 %v189, %v187
  %v236 = vpack.c.b16 %v192, %v190
  %v237 = vpack.c.b16 %v193, %v191
  %v238 = vpack.c.b16 %v196, %v194
  %v239 = vpack.c.b16 %v197, %v195
  %v240 = vpack.c.b16 %v200, %v198
  %v241 = vpack.c.b16 %v201, %v199
  %v242 = vpack.c.b16 %v204, %v202
  %v243 = vpack.c.b16 %v205, %v203
  %v244 = vpack.c.b16 %v208, %v206
  %v245 = vpack.c.b16 %v209, %v207
  %v246 = vpack.c.b16 %v212, %v210
  %v247 = vpack.c.b16 %v213, %v211
  %v248 = vpack.c.b16 %v216, %v214
  %v249 = vpack.c.b16 %v217, %v215
  %282 = vmatpush.bf16.msra.mxu0 %v232
  %283 = vmatpush.bf16.msra.mxu0 %v230
  %284 = vmatpush.bf16.msra.mxu0 %v228
  %285 = vmatpush.bf16.msra.mxu0 %v226
  %286 = vmatpush.bf16.msra.mxu0 %v224
  %287 = vmatpush.bf16.msra.mxu0 %v222
  %288 = vmatpush.bf16.msra.mxu0 %v220
  %289 = vmatpush.bf16.msra.mxu0 %v218
  %290 = vmatmul.bf16.gmra.mxu0 %v106
  %v291 = vpop.f32.mrf.mxu0
  %v292 = vadd.f32 %v78, %v291
  %v293 = vpop.f32.mrf.mxu0
  %v294 = vadd.f32 %v78, %v293
  %295 = vmatmul.bf16.gmra.mxu0 %v108
  %v296 = vpop.f32.mrf.mxu0
  %v297 = vadd.f32 %v78, %v296
  %v298 = vpop.f32.mrf.mxu0
  %v299 = vadd.f32 %v78, %v298
  %300 = vmatmul.bf16.gmra.mxu0 %v110
  %v301 = vpop.f32.mrf.mxu0
  %v302 = vadd.f32 %v78, %v301
  %v303 = vpop.f32.mrf.mxu0
  %v304 = vadd.f32 %v78, %v303
  %305 = vmatmul.bf16.gmra.mxu0 %v112
  %v306 = vpop.f32.mrf.mxu0
  %v307 = vadd.f32 %v78, %v306
  %v308 = vpop.f32.mrf.mxu0
  %v309 = vadd.f32 %v78, %v308
  %310 = vdwg.mxu0
  %311 = vmatpush.bf16.msra.mxu0 %v248
  %312 = vmatpush.bf16.msra.mxu0 %v246
  %313 = vmatpush.bf16.msra.mxu0 %v244
  %314 = vmatpush.bf16.msra.mxu0 %v242
  %315 = vmatpush.bf16.msra.mxu0 %v240
  %316 = vmatpush.bf16.msra.mxu0 %v238
  %317 = vmatpush.bf16.msra.mxu0 %v236
  %318 = vmatpush.bf16.msra.mxu0 %v234
  %319 = vmatmul.bf16.gmra.mxu0 %v107
  %v320 = vpop.f32.mrf.mxu0
  %v321 = vadd.f32 %v292, %v320
  %v322 = vpop.f32.mrf.mxu0
  %v323 = vadd.f32 %v294, %v322
  %324 = vmatmul.bf16.gmra.mxu0 %v109
  %v325 = vpop.f32.mrf.mxu0
  %v326 = vadd.f32 %v297, %v325
  %v327 = vpop.f32.mrf.mxu0
  %v328 = vadd.f32 %v299, %v327
  %329 = vmatmul.bf16.gmra.mxu0 %v111
  %v330 = vpop.f32.mrf.mxu0
  %v331 = vadd.f32 %v302, %v330
  %v332 = vpop.f32.mrf.mxu0
  %v333 = vadd.f32 %v304, %v332
  %334 = vmatmul.bf16.gmra.mxu0 %v113
  %v335 = vpop.f32.mrf.mxu0
  %v336 = vadd.f32 %v307, %v335
  %v337 = vpop.f32.mrf.mxu0
  %v338 = vadd.f32 %v309, %v337
  %339 = vdwg.mxu0
  %340 = vmatpush.bf16.msra.mxu0 %v233
  %341 = vmatpush.bf16.msra.mxu0 %v231
  %342 = vmatpush.bf16.msra.mxu0 %v229
  %343 = vmatpush.bf16.msra.mxu0 %v227
  %344 = vmatpush.bf16.msra.mxu0 %v225
  %345 = vmatpush.bf16.msra.mxu0 %v223
  %346 = vmatpush.bf16.msra.mxu0 %v221
  %347 = vmatpush.bf16.msra.mxu0 %v219
  %348 = vmatmul.bf16.gmra.mxu0 %v106
  %v349 = vpop.f32.mrf.mxu0
  %v350 = vadd.f32 %v79, %v349
  %v351 = vpop.f32.mrf.mxu0
  %v352 = vadd.f32 %v79, %v351
  %353 = vmatmul.bf16.gmra.mxu0 %v108
  %v354 = vpop.f32.mrf.mxu0
  %v355 = vadd.f32 %v79, %v354
  %v356 = vpop.f32.mrf.mxu0
  %v357 = vadd.f32 %v79, %v356
  %358 = vmatmul.bf16.gmra.mxu0 %v110
  %v359 = vpop.f32.mrf.mxu0
  %v360 = vadd.f32 %v79, %v359
  %v361 = vpop.f32.mrf.mxu0
  %v362 = vadd.f32 %v79, %v361
  %363 = vmatmul.bf16.gmra.mxu0 %v112
  %v364 = vpop.f32.mrf.mxu0
  %v365 = vadd.f32 %v79, %v364
  %v366 = vpop.f32.mrf.mxu0
  %v367 = vadd.f32 %v79, %v366
  %368 = vdwg.mxu0
  %369 = vmatpush.bf16.msra.mxu0 %v249
  %370 = vmatpush.bf16.msra.mxu0 %v247
  %371 = vmatpush.bf16.msra.mxu0 %v245
  %372 = vmatpush.bf16.msra.mxu0 %v243
  %373 = vmatpush.bf16.msra.mxu0 %v241
  %374 = vmatpush.bf16.msra.mxu0 %v239
  %375 = vmatpush.bf16.msra.mxu0 %v237
  %376 = vmatpush.bf16.msra.mxu0 %v235
  %377 = vmatmul.bf16.gmra.mxu0 %v107
  %v378 = vpop.f32.mrf.mxu0
  %v379 = vadd.f32 %v350, %v378
  %v380 = vpop.f32.mrf.mxu0
  %v381 = vadd.f32 %v352, %v380
  %382 = vmatmul.bf16.gmra.mxu0 %v109
  %v383 = vpop.f32.mrf.mxu0
  %v384 = vadd.f32 %v355, %v383
  %v385 = vpop.f32.mrf.mxu0
  %v386 = vadd.f32 %v357, %v385
  %387 = vmatmul.bf16.gmra.mxu0 %v111
  %v388 = vpop.f32.mrf.mxu0
  %v389 = vadd.f32 %v360, %v388
  %v390 = vpop.f32.mrf.mxu0
  %v391 = vadd.f32 %v362, %v390
  %392 = vmatmul.bf16.gmra.mxu0 %v113
  %v393 = vpop.f32.mrf.mxu0
  %v394 = vadd.f32 %v365, %v393
  %v395 = vpop.f32.mrf.mxu0
  %v396 = vadd.f32 %v367, %v395
  %397 = vdwg.mxu0
  %v398 = vmax.f32 %v321, 0.0
  %v399 = vmax.f32 %v379, 0.0
  %v400 = vmax.f32 %v323, 0.0
  %v401 = vmax.f32 %v381, 0.0
  %v402 = vmax.f32 %v326, 0.0
  %v403 = vmax.f32 %v384, 0.0
  %v404 = vmax.f32 %v328, 0.0
  %v405 = vmax.f32 %v386, 0.0
  %v406 = vmax.f32 %v331, 0.0
  %v407 = vmax.f32 %v389, 0.0
  %v408 = vmax.f32 %v333, 0.0
  %v409 = vmax.f32 %v391, 0.0
  %v410 = vmax.f32 %v336, 0.0
  %v411 = vmax.f32 %v394, 0.0
  %v412 = vmax.f32 %v338, 0.0
  %v413 = vmax.f32 %v396, 0.0
  %v414 = vpack.c.bf16 %v399, 0.0
  %v415 = vpack.c.bf16 %v403, %v401
  %v416 = vpack.c.bf16 %v407, %v405
  %v417 = vpack.c.bf16 %v411, %v409
  %v418 = vpack.c.bf16 %v400, %v398
  %v419 = vpack.c.bf16 %v401, %v399
  %v420 = vpack.c.bf16 %v404, %v402
  %v421 = vpack.c.bf16 %v405, %v403
  %v422 = vpack.c.bf16 %v408, %v406
  %v423 = vpack.c.bf16 %v409, %v407
  %v424 = vpack.c.bf16 %v412, %v410
  %v425 = vpack.c.bf16 %v413, %v411
  %v426 = vld [vmem:[%s3] sm:$0xf]
  %v427 = vld [vmem:[%s3 + $0x4] sm:$0xf]
  %v428 = vld [vmem:[%s3 + $0x8] sm:$0xf]
  %v429 = vld [vmem:[%s3 + $0xc] sm:$0xf]
  %v430 = vld [vmem:[%s3 + $0x10] sm:$0xf]
  %v431 = vld [vmem:[%s3 + $0x14] sm:$0xf]
  %v432 = vld [vmem:[%s3 + $0x18] sm:$0xf]
  %v433 = vld [vmem:[%s3 + $0x1c] sm:$0xf]
  %v434 = vld [vmem:[%s3 + $0x20] sm:$0xf]
  %v435 = vld [vmem:[%s3 + $0x24] sm:$0xf]
  %v436 = vld [vmem:[%s3 + $0x28] sm:$0xf]
  %v437 = vld [vmem:[%s3 + $0x2c] sm:$0xf]
  %v438 = vld [vmem:[%s3 + $0x30] sm:$0xf]
  %v439 = vld [vmem:[%s3 + $0x34] sm:$0xf]
  %v440 = vld [vmem:[%s3 + $0x38] sm:$0xf]
  %v441 = vld [vmem:[%s3 + $0x3c] sm:$0xf]
  %v442 = vld [vmem:[%s3 + $0x40] sm:$0xf]
  %v443 = vld [vmem:[%s3 + $0x44] sm:$0xf]
  %v444 = vld [vmem:[%s3 + $0x48] sm:$0xf]
  %v445 = vld [vmem:[%s3 + $0x4c] sm:$0xf]
  %v446 = vld [vmem:[%s3 + $0x50] sm:$0xf]
  %v447 = vld [vmem:[%s3 + $0x54] sm:$0xf]
  %v448 = vld [vmem:[%s3 + $0x58] sm:$0xf]
  %v449 = vld [vmem:[%s3 + $0x5c] sm:$0xf]
  %v450 = vld [vmem:[%s3 + $0x60] sm:$0xf]
  %v451 = vld [vmem:[%s3 + $0x64] sm:$0xf]
  %v452 = vld [vmem:[%s3 + $0x68] sm:$0xf]
  %v453 = vld [vmem:[%s3 + $0x6c] sm:$0xf]
  %v454 = vld [vmem:[%s3 + $0x70] sm:$0xf]
  %v455 = vld [vmem:[%s3 + $0x74] sm:$0xf]
  %v456 = vld [vmem:[%s3 + $0x78] sm:$0xf]
  %v457 = vld [vmem:[%s3 + $0x7c] sm:$0xf]
  %v458 = vld [vmem:[%s4] sm:$0xf]
  %v459 = vld [vmem:[%s4 + $0x4] sm:$0xf]
  %v460 = vld [vmem:[%s4 + $0x8] sm:$0xf]
  %v461 = vld [vmem:[%s4 + $0xc] sm:$0xf]
  %v462 = vld [vmem:[%s4 + $0x10] sm:$0xf]
  %v463 = vld [vmem:[%s4 + $0x14] sm:$0xf]
  %v464 = vld [vmem:[%s4 + $0x18] sm:$0xf]
  %v465 = vld [vmem:[%s4 + $0x1c] sm:$0xf]
  %v466 = vld [vmem:[%s4 + $0x20] sm:$0xf]
  %v467 = vld [vmem:[%s4 + $0x24] sm:$0xf]
  %v468 = vld [vmem:[%s4 + $0x28] sm:$0xf]
  %v469 = vld [vmem:[%s4 + $0x2c] sm:$0xf]
  %v470 = vld [vmem:[%s4 + $0x30] sm:$0xf]
  %v471 = vld [vmem:[%s4 + $0x34] sm:$0xf]
  %v472 = vld [vmem:[%s4 + $0x38] sm:$0xf]
  %v473 = vld [vmem:[%s4 + $0x3c] sm:$0xf]
  %v490 = vunpack.c.l.b16 %v458
  %v491 = vunpack.c.l.b16 %v459
  %v492 = vunpack.c.l.b16 %v460
  %v493 = vunpack.c.l.b16 %v461
  %v494 = vunpack.c.l.b16 %v462
  %v495 = vunpack.c.l.b16 %v463
  %v496 = vunpack.c.l.b16 %v464
  %v497 = vunpack.c.l.b16 %v465
  %v498 = vunpack.c.l.b16 %v466
  %v499 = vunpack.c.l.b16 %v467
  %v500 = vunpack.c.l.b16 %v468
  %v501 = vunpack.c.l.b16 %v469
  %v502 = vunpack.c.l.b16 %v470
  %v503 = vunpack.c.l.b16 %v471
  %v504 = vunpack.c.l.b16 %v472
  %v505 = vunpack.c.l.b16 %v473
  %v506 = vpack.c.b16 %v491, %v490
  %v507 = vpack.c.b16 %v493, %v492
  %v508 = vpack.c.b16 %v495, %v494
  %v509 = vpack.c.b16 %v497, %v496
  %v510 = vpack.c.b16 %v499, %v498
  %v511 = vpack.c.b16 %v501, %v500
  %v512 = vpack.c.b16 %v503, %v502
  %v513 = vpack.c.b16 %v505, %v504
  %522 = vmatpush.bf16.msra.mxu0 %v513
  %523 = vmatpush.bf16.msra.mxu0 %v512
  %524 = vmatpush.bf16.msra.mxu0 %v511
  %525 = vmatpush.bf16.msra.mxu0 %v510
  %526 = vmatpush.bf16.msra.mxu0 %v509
  %527 = vmatpush.bf16.msra.mxu0 %v508
  %528 = vmatpush.bf16.msra.mxu0 %v507
  %529 = vmatpush.bf16.msra.mxu0 %v506
  %530 = vmatmul.bf16.gmra.mxu0 %v414
  %v531 = vpop.f32.mrf.mxu0
  %v532 = vadd.f32 0.0, %v531
  %v533 = vpop.f32.mrf.mxu0
  %v534 = vadd.f32 0.0, %v533
  %535 = vmatmul.bf16.gmra.mxu0 %v415
  %v536 = vpop.f32.mrf.mxu0
  %v537 = vadd.f32 0.0, %v536
  %v538 = vpop.f32.mrf.mxu0
  %v539 = vadd.f32 0.0, %v538
  %540 = vmatmul.bf16.gmra.mxu0 %v416
  %v541 = vpop.f32.mrf.mxu0
  %v542 = vadd.f32 0.0, %v541
  %v543 = vpop.f32.mrf.mxu0
  %v544 = vadd.f32 0.0, %v543
  %545 = vmatmul.bf16.gmra.mxu0 %v417
  %v546 = vpop.f32.mrf.mxu0
  %v547 = vadd.f32 0.0, %v546
  %v548 = vpop.f32.mrf.mxu0
  %v549 = vadd.f32 0.0, %v548
  %550 = vdwg.mxu0
  %v583 = vunpack.c.l.b16 %v426
  %v584 = vunpack.c.l.b16 %v427
  %v585 = vunpack.c.l.b16 %v428
  %v586 = vunpack.c.l.b16 %v429
  %v587 = vunpack.c.l.b16 %v430
  %v588 = vunpack.c.l.b16 %v431
  %v589 = vunpack.c.l.b16 %v432
  %v590 = vunpack.c.l.b16 %v433
  %v591 = vunpack.c.l.b16 %v434
  %v592 = vunpack.c.l.b16 %v435
  %v593 = vunpack.c.l.b16 %v436
  %v594 = vunpack.c.l.b16 %v437
  %v595 = vunpack.c.l.b16 %v438
  %v596 = vunpack.c.l.b16 %v439
  %v597 = vunpack.c.l.b16 %v440
  %v598 = vunpack.c.l.b16 %v441
  %v599 = vunpack.c.l.b16 %v442
  %v600 = vunpack.c.l.b16 %v443
  %v601 = vunpack.c.l.b16 %v444
  %v602 = vunpack.c.l.b16 %v445
  %v603 = vunpack.c.l.b16 %v446
  %v604 = vunpack.c.l.b16 %v447
  %v605 = vunpack.c.l.b16 %v448
  %v606 = vunpack.c.l.b16 %v449
  %v607 = vunpack.c.l.b16 %v450
  %v608 = vunpack.c.l.b16 %v451
  %v609 = vunpack.c.l.b16 %v452
  %v610 = vunpack.c.l.b16 %v453
  %v611 = vunpack.c.l.b16 %v454
  %v612 = vunpack.c.l.b16 %v455
  %v613 = vunpack.c.l.b16 %v456
  %v614 = vunpack.c.l.b16 %v457
  %v615 = vpack.c.b16 %v584, %v583
  %v616 = vpack.c.b16 %v586, %v585
  %v617 = vpack.c.b16 %v588, %v587
  %v618 = vpack.c.b16 %v590, %v589
  %v619 = vpack.c.b16 %v592, %v591
  %v620 = vpack.c.b16 %v594, %v593
  %v621 = vpack.c.b16 %v596, %v595
  %v622 = vpack.c.b16 %v598, %v597
  %v623 = vpack.c.b16 %v600, %v599
  %v624 = vpack.c.b16 %v602, %v601
  %v625 = vpack.c.b16 %v604, %v603
  %v626 = vpack.c.b16 %v606, %v605
  %v627 = vpack.c.b16 %v608, %v607
  %v628 = vpack.c.b16 %v610, %v609
  %v629 = vpack.c.b16 %v612, %v611
  %v630 = vpack.c.b16 %v614, %v613
  %647 = vmatpush.bf16.msra.mxu0 %v622
  %648 = vmatpush.bf16.msra.mxu0 %v621
  %649 = vmatpush.bf16.msra.mxu0 %v620
  %650 = vmatpush.bf16.msra.mxu0 %v619
  %651 = vmatpush.bf16.msra.mxu0 %v618
  %652 = vmatpush.bf16.msra.mxu0 %v617
  %653 = vmatpush.bf16.msra.mxu0 %v616
  %654 = vmatpush.bf16.msra.mxu0 %v615
  %655 = vmatmul.bf16.gmra.mxu0 %v418
  %v656 = vpop.f32.mrf.mxu0
  %v657 = vadd.f32 %v532, %v656
  %v658 = vpop.f32.mrf.mxu0
  %v659 = vadd.f32 %v534, %v658
  %660 = vmatmul.bf16.gmra.mxu0 %v420
  %v661 = vpop.f32.mrf.mxu0
  %v662 = vadd.f32 %v537, %v661
  %v663 = vpop.f32.mrf.mxu0
  %v664 = vadd.f32 %v539, %v663
  %665 = vmatmul.bf16.gmra.mxu0 %v422
  %v666 = vpop.f32.mrf.mxu0
  %v667 = vadd.f32 %v542, %v666
  %v668 = vpop.f32.mrf.mxu0
  %v669 = vadd.f32 %v544, %v668
  %670 = vmatmul.bf16.gmra.mxu0 %v424
  %v671 = vpop.f32.mrf.mxu0
  %v672 = vadd.f32 %v547, %v671
  %v673 = vpop.f32.mrf.mxu0
  %v674 = vadd.f32 %v549, %v673
  %675 = vdwg.mxu0
  %676 = vmatpush.bf16.msra.mxu0 %v630
  %677 = vmatpush.bf16.msra.mxu0 %v629
  %678 = vmatpush.bf16.msra.mxu0 %v628
  %679 = vmatpush.bf16.msra.mxu0 %v627
  %680 = vmatpush.bf16.msra.mxu0 %v626
  %681 = vmatpush.bf16.msra.mxu0 %v625
  %682 = vmatpush.bf16.msra.mxu0 %v624
  %683 = vmatpush.bf16.msra.mxu0 %v623
  %684 = vmatmul.bf16.gmra.mxu0 %v419
  %v685 = vpop.f32.mrf.mxu0
  %v686 = vadd.f32 %v657, %v685
  %v687 = vpop.f32.mrf.mxu0
  %v688 = vadd.f32 %v659, %v687
  %689 = vmatmul.bf16.gmra.mxu0 %v421
  %v690 = vpop.f32.mrf.mxu0
  %v691 = vadd.f32 %v662, %v690
  %v692 = vpop.f32.mrf.mxu0
  %v693 = vadd.f32 %v664, %v692
  %694 = vmatmul.bf16.gmra.mxu0 %v423
  %v695 = vpop.f32.mrf.mxu0
  %v696 = vadd.f32 %v667, %v695
  %v697 = vpop.f32.mrf.mxu0
  %v698 = vadd.f32 %v669, %v697
  %699 = vmatmul.bf16.gmra.mxu0 %v425
  %v700 = vpop.f32.mrf.mxu0
  %v701 = vadd.f32 %v672, %v700
  %v702 = vpop.f32.mrf.mxu0
  %v703 = vadd.f32 %v674, %v702
  %704 = vdwg.mxu0
  %v705 = vld [vmem:[%s5] sm:$0x1]
  %v707 = vperm.slane %v705, 0
  %v709 = vadd.f32 %v686, %v707
  %v710 = vadd.f32 %v688, %v707
  %v711 = vadd.f32 %v691, %v707
  %v712 = vadd.f32 %v693, %v707
  %v713 = vadd.f32 %v696, %v707
  %v714 = vadd.f32 %v698, %v707
  %v715 = vadd.f32 %v701, %v707
  %v716 = vadd.f32 %v703, %v707
  %v717 = vmax.f32 %v709, 0.0
  %v718 = vmax.f32 %v710, 0.0
  %v719 = vmax.f32 %v711, 0.0
  %v720 = vmax.f32 %v712, 0.0
  %v721 = vmax.f32 %v713, 0.0
  %v722 = vmax.f32 %v714, 0.0
  %v723 = vmax.f32 %v715, 0.0
  %v724 = vmax.f32 %v716, 0.0
  %v725 = vpack.c.bf16 %v717, %v717
  %v726 = vld [vmem:[%s6] sm:$0xf]
  %v727 = vld [vmem:[%s6 + $0x4] sm:$0xf]
  %v728 = vld [vmem:[%s6 + $0x8] sm:$0xf]
  %v729 = vld [vmem:[%s6 + $0xc] sm:$0xf]
  %v730 = vld [vmem:[%s6 + $0x10] sm:$0xf]
  %v731 = vld [vmem:[%s6 + $0x14] sm:$0xf]
  %v732 = vld [vmem:[%s6 + $0x18] sm:$0xf]
  %v733 = vld [vmem:[%s6 + $0x1c] sm:$0xf]
  %v734 = vld [vmem:[%s6 + $0x20] sm:$0xf]
  %v735 = vld [vmem:[%s6 + $0x24] sm:$0xf]
  %v736 = vld [vmem:[%s6 + $0x28] sm:$0xf]
  %v737 = vld [vmem:[%s6 + $0x2c] sm:$0xf]
  %v738 = vld [vmem:[%s6 + $0x30] sm:$0xf]
  %v739 = vld [vmem:[%s6 + $0x34] sm:$0xf]
  %v740 = vld [vmem:[%s6 + $0x38] sm:$0xf]
  %v741 = vld [vmem:[%s6 + $0x3c] sm:$0xf]
  %v742 = vpack.c.bf16 %v718, %v718
  %s743 = scalar_lea.vmem %s6, 64
  %v744 = vld [vmem:[%s743] sm:$0xf]
  %v745 = vld [vmem:[%s743 + $0x4] sm:$0xf]
  %v746 = vld [vmem:[%s743 + $0x8] sm:$0xf]
  %v747 = vld [vmem:[%s743 + $0xc] sm:$0xf]
  %v748 = vld [vmem:[%s743 + $0x10] sm:$0xf]
  %v749 = vld [vmem:[%s743 + $0x14] sm:$0xf]
  %v750 = vld [vmem:[%s743 + $0x18] sm:$0xf]
  %v751 = vld [vmem:[%s743 + $0x1c] sm:$0xf]
  %v752 = vld [vmem:[%s743 + $0x20] sm:$0xf]
  %v753 = vld [vmem:[%s743 + $0x24] sm:$0xf]
  %v754 = vld [vmem:[%s743 + $0x28] sm:$0xf]
  %v755 = vld [vmem:[%s743 + $0x2c] sm:$0xf]
  %v756 = vld [vmem:[%s743 + $0x30] sm:$0xf]
  %v757 = vld [vmem:[%s743 + $0x34] sm:$0xf]
  %v758 = vld [vmem:[%s743 + $0x38] sm:$0xf]
  %v759 = vld [vmem:[%s743 + $0x3c] sm:$0xf]
  %v776 = vunpack.c.l.b16 %v744
  %v777 = vunpack.c.l.b16 %v745
  %v778 = vunpack.c.l.b16 %v746
  %v779 = vunpack.c.l.b16 %v747
  %v780 = vunpack.c.l.b16 %v748
  %v781 = vunpack.c.l.b16 %v749
  %v782 = vunpack.c.l.b16 %v750
  %v783 = vunpack.c.l.b16 %v751
  %v784 = vunpack.c.l.b16 %v752
  %v785 = vunpack.c.l.b16 %v753
  %v786 = vunpack.c.l.b16 %v754
  %v787 = vunpack.c.l.b16 %v755
  %v788 = vunpack.c.l.b16 %v756
  %v789 = vunpack.c.l.b16 %v757
  %v790 = vunpack.c.l.b16 %v758
  %v791 = vunpack.c.l.b16 %v759
  %v792 = vpack.c.b16 %v777, %v776
  %v793 = vpack.c.b16 %v779, %v778
  %v794 = vpack.c.b16 %v781, %v780
  %v795 = vpack.c.b16 %v783, %v782
  %v796 = vpack.c.b16 %v785, %v784
  %v797 = vpack.c.b16 %v787, %v786
  %v798 = vpack.c.b16 %v789, %v788
  %v799 = vpack.c.b16 %v791, %v790
  %808 = vmatpush.bf16.msra.mxu0 %v799
  %809 = vmatpush.bf16.msra.mxu0 %v798
  %810 = vmatpush.bf16.msra.mxu0 %v797
  %811 = vmatpush.bf16.msra.mxu0 %v796
  %812 = vmatpush.bf16.msra.mxu0 %v795
  %813 = vmatpush.bf16.msra.mxu0 %v794
  %814 = vmatpush.bf16.msra.mxu0 %v793
  %815 = vmatpush.bf16.msra.mxu0 %v792
  %816 = vmatmul.bf16.gmra.mxu0 %v742
  %v817 = vpop.f32.mrf.mxu0
  %v818 = vadd.f32 0.0, %v817
  %v819 = vpop.f32.mrf.mxu0
  %820 = vdwg.mxu0
  %v837 = vunpack.c.l.b16 %v726
  %v838 = vunpack.c.l.b16 %v727
  %v839 = vunpack.c.l.b16 %v728
  %v840 = vunpack.c.l.b16 %v729
  %v841 = vunpack.c.l.b16 %v730
  %v842 = vunpack.c.l.b16 %v731
  %v843 = vunpack.c.l.b16 %v732
  %v844 = vunpack.c.l.b16 %v733
  %v845 = vunpack.c.l.b16 %v734
  %v846 = vunpack.c.l.b16 %v735
  %v847 = vunpack.c.l.b16 %v736
  %v848 = vunpack.c.l.b16 %v737
  %v849 = vunpack.c.l.b16 %v738
  %v850 = vunpack.c.l.b16 %v739
  %v851 = vunpack.c.l.b16 %v740
  %v852 = vunpack.c.l.b16 %v741
  %v853 = vpack.c.b16 %v838, %v837
  %v854 = vpack.c.b16 %v840, %v839
  %v855 = vpack.c.b16 %v842, %v841
  %v856 = vpack.c.b16 %v844, %v843
  %v857 = vpack.c.b16 %v846, %v845
  %v858 = vpack.c.b16 %v848, %v847
  %v859 = vpack.c.b16 %v850, %v849
  %v860 = vpack.c.b16 %v852, %v851
  %869 = vmatpush.bf16.msra.mxu0 %v860
  %870 = vmatpush.bf16.msra.mxu0 %v859
  %871 = vmatpush.bf16.msra.mxu0 %v858
  %872 = vmatpush.bf16.msra.mxu0 %v857
  %873 = vmatpush.bf16.msra.mxu0 %v856
  %874 = vmatpush.bf16.msra.mxu0 %v855
  %875 = vmatpush.bf16.msra.mxu0 %v854
  %876 = vmatpush.bf16.msra.mxu0 %v853
  %877 = vmatmul.bf16.gmra.mxu0 %v725
  %v878 = vpop.f32.mrf.mxu0
  %v879 = vadd.f32 %v818, %v878
  %v880 = vpop.f32.mrf.mxu0
  %881 = vdwg.mxu0
  %v882 = vpack.c.bf16 %v719, %v719
  %s883 = scalar_lea.vmem %s6, 128
  %v884 = vld [vmem:[%s883] sm:$0xf]
  %v885 = vld [vmem:[%s883 + $0x4] sm:$0xf]
  %v886 = vld [vmem:[%s883 + $0x8] sm:$0xf]
  %v887 = vld [vmem:[%s883 + $0xc] sm:$0xf]
  %v888 = vld [vmem:[%s883 + $0x10] sm:$0xf]
  %v889 = vld [vmem:[%s883 + $0x14] sm:$0xf]
  %v890 = vld [vmem:[%s883 + $0x18] sm:$0xf]
  %v891 = vld [vmem:[%s883 + $0x1c] sm:$0xf]
  %v892 = vld [vmem:[%s883 + $0x20] sm:$0xf]
  %v893 = vld [vmem:[%s883 + $0x24] sm:$0xf]
  %v894 = vld [vmem:[%s883 + $0x28] sm:$0xf]
  %v895 = vld [vmem:[%s883 + $0x2c] sm:$0xf]
  %v896 = vld [vmem:[%s883 + $0x30] sm:$0xf]
  %v897 = vld [vmem:[%s883 + $0x34] sm:$0xf]
  %v898 = vld [vmem:[%s883 + $0x38] sm:$0xf]
  %v899 = vld [vmem:[%s883 + $0x3c] sm:$0xf]
  %v916 = vunpack.c.l.b16 %v884
  %v917 = vunpack.c.l.b16 %v885
  %v918 = vunpack.c.l.b16 %v886
  %v919 = vunpack.c.l.b16 %v887
  %v920 = vunpack.c.l.b16 %v888
  %v921 = vunpack.c.l.b16 %v889
  %v922 = vunpack.c.l.b16 %v890
  %v923 = vunpack.c.l.b16 %v891
  %v924 = vunpack.c.l.b16 %v892
  %v925 = vunpack.c.l.b16 %v893
  %v926 = vunpack.c.l.b16 %v894
  %v927 = vunpack.c.l.b16 %v895
  %v928 = vunpack.c.l.b16 %v896
  %v929 = vunpack.c.l.b16 %v897
  %v930 = vunpack.c.l.b16 %v898
  %v931 = vunpack.c.l.b16 %v899
  %v932 = vpack.c.b16 %v917, %v916
  %v933 = vpack.c.b16 %v919, %v918
  %v934 = vpack.c.b16 %v921, %v920
  %v935 = vpack.c.b16 %v923, %v922
  %v936 = vpack.c.b16 %v925, %v924
  %v937 = vpack.c.b16 %v927, %v926
  %v938 = vpack.c.b16 %v929, %v928
  %v939 = vpack.c.b16 %v931, %v930
  %948 = vmatpush.bf16.msra.mxu0 %v939
  %949 = vmatpush.bf16.msra.mxu0 %v938
  %950 = vmatpush.bf16.msra.mxu0 %v937
  %951 = vmatpush.bf16.msra.mxu0 %v936
  %952 = vmatpush.bf16.msra.mxu0 %v935
  %953 = vmatpush.bf16.msra.mxu0 %v934
  %954 = vmatpush.bf16.msra.mxu0 %v933
  %955 = vmatpush.bf16.msra.mxu0 %v932
  %956 = vmatmul.bf16.gmra.mxu0 %v882
  %v957 = vpop.f32.mrf.mxu0
  %v958 = vadd.f32 0.0, %v957
  %v959 = vpop.f32.mrf.mxu0
  %960 = vdwg.mxu0
  %v961 = vadd.f32 %v879, %v958
  %v962 = vpack.c.bf16 %v720, %v720
  %s963 = scalar_lea.vmem %s6, 192
  %v964 = vld [vmem:[%s963] sm:$0xf]
  %v965 = vld [vmem:[%s963 + $0x4] sm:$0xf]
  %v966 = vld [vmem:[%s963 + $0x8] sm:$0xf]
  %v967 = vld [vmem:[%s963 + $0xc] sm:$0xf]
  %v968 = vld [vmem:[%s963 + $0x10] sm:$0xf]
  %v969 = vld [vmem:[%s963 + $0x14] sm:$0xf]
  %v970 = vld [vmem:[%s963 + $0x18] sm:$0xf]
  %v971 = vld [vmem:[%s963 + $0x1c] sm:$0xf]
  %v972 = vld [vmem:[%s963 + $0x20] sm:$0xf]
  %v973 = vld [vmem:[%s963 + $0x24] sm:$0xf]
  %v974 = vld [vmem:[%s963 + $0x28] sm:$0xf]
  %v975 = vld [vmem:[%s963 + $0x2c] sm:$0xf]
  %v976 = vld [vmem:[%s963 + $0x30] sm:$0xf]
  %v977 = vld [vmem:[%s963 + $0x34] sm:$0xf]
  %v978 = vld [vmem:[%s963 + $0x38] sm:$0xf]
  %v979 = vld [vmem:[%s963 + $0x3c] sm:$0xf]
  %v996 = vunpack.c.l.b16 %v964
  %v997 = vunpack.c.l.b16 %v965
  %v998 = vunpack.c.l.b16 %v966
  %v999 = vunpack.c.l.b16 %v967
  %v1000 = vunpack.c.l.b16 %v968
  %v1001 = vunpack.c.l.b16 %v969
  %v1002 = vunpack.c.l.b16 %v970
  %v1003 = vunpack.c.l.b16 %v971
  %v1004 = vunpack.c.l.b16 %v972
  %v1005 = vunpack.c.l.b16 %v973
  %v1006 = vunpack.c.l.b16 %v974
  %v1007 = vunpack.c.l.b16 %v975
  %v1008 = vunpack.c.l.b16 %v976
  %v1009 = vunpack.c.l.b16 %v977
  %v1010 = vunpack.c.l.b16 %v978
  %v1011 = vunpack.c.l.b16 %v979
  %v1012 = vpack.c.b16 %v997, %v996
  %v1013 = vpack.c.b16 %v999, %v998
  %v1014 = vpack.c.b16 %v1001, %v1000
  %v1015 = vpack.c.b16 %v1003, %v1002
  %v1016 = vpack.c.b16 %v1005, %v1004
  %v1017 = vpack.c.b16 %v1007, %v1006
  %v1018 = vpack.c.b16 %v1009, %v1008
  %v1019 = vpack.c.b16 %v1011, %v1010
  %1028 = vmatpush.bf16.msra.mxu0 %v1019
  %1029 = vmatpush.bf16.msra.mxu0 %v1018
  %1030 = vmatpush.bf16.msra.mxu0 %v1017
  %1031 = vmatpush.bf16.msra.mxu0 %v1016
  %1032 = vmatpush.bf16.msra.mxu0 %v1015
  %1033 = vmatpush.bf16.msra.mxu0 %v1014
  %1034 = vmatpush.bf16.msra.mxu0 %v1013
  %1035 = vmatpush.bf16.msra.mxu0 %v1012
  %1036 = vmatmul.bf16.gmra.mxu0 %v962
  %v1037 = vpop.f32.mrf.mxu0
  %v1038 = vadd.f32 0.0, %v1037
  %v1039 = vpop.f32.mrf.mxu0
  %1040 = vdwg.mxu0
  %v1041 = vadd.f32 %v961, %v1038
  %v1042 = vpack.c.bf16 %v721, %v721
  %s1043 = scalar_lea.vmem %s6, 256
  %v1044 = vld [vmem:[%s1043] sm:$0xf]
  %v1045 = vld [vmem:[%s1043 + $0x4] sm:$0xf]
  %v1046 = vld [vmem:[%s1043 + $0x8] sm:$0xf]
  %v1047 = vld [vmem:[%s1043 + $0xc] sm:$0xf]
  %v1048 = vld [vmem:[%s1043 + $0x10] sm:$0xf]
  %v1049 = vld [vmem:[%s1043 + $0x14] sm:$0xf]
  %v1050 = vld [vmem:[%s1043 + $0x18] sm:$0xf]
  %v1051 = vld [vmem:[%s1043 + $0x1c] sm:$0xf]
  %v1052 = vld [vmem:[%s1043 + $0x20] sm:$0xf]
  %v1053 = vld [vmem:[%s1043 + $0x24] sm:$0xf]
  %v1054 = vld [vmem:[%s1043 + $0x28] sm:$0xf]
  %v1055 = vld [vmem:[%s1043 + $0x2c] sm:$0xf]
  %v1056 = vld [vmem:[%s1043 + $0x30] sm:$0xf]
  %v1057 = vld [vmem:[%s1043 + $0x34] sm:$0xf]
  %v1058 = vld [vmem:[%s1043 + $0x38] sm:$0xf]
  %v1059 = vld [vmem:[%s1043 + $0x3c] sm:$0xf]
  %v1076 = vunpack.c.l.b16 %v1044
  %v1077 = vunpack.c.l.b16 %v1045
  %v1078 = vunpack.c.l.b16 %v1046
  %v1079 = vunpack.c.l.b16 %v1047
  %v1080 = vunpack.c.l.b16 %v1048
  %v1081 = vunpack.c.l.b16 %v1049
  %v1082 = vunpack.c.l.b16 %v1050
  %v1083 = vunpack.c.l.b16 %v1051
  %v1084 = vunpack.c.l.b16 %v1052
  %v1085 = vunpack.c.l.b16 %v1053
  %v1086 = vunpack.c.l.b16 %v1054
  %v1087 = vunpack.c.l.b16 %v1055
  %v1088 = vunpack.c.l.b16 %v1056
  %v1089 = vunpack.c.l.b16 %v1057
  %v1090 = vunpack.c.l.b16 %v1058
  %v1091 = vunpack.c.l.b16 %v1059
  %v1092 = vpack.c.b16 %v1077, %v1076
  %v1093 = vpack.c.b16 %v1079, %v1078
  %v1094 = vpack.c.b16 %v1081, %v1080
  %v1095 = vpack.c.b16 %v1083, %v1082
  %v1096 = vpack.c.b16 %v1085, %v1084
  %v1097 = vpack.c.b16 %v1087, %v1086
  %v1098 = vpack.c.b16 %v1089, %v1088
  %v1099 = vpack.c.b16 %v1091, %v1090
  %1108 = vmatpush.bf16.msra.mxu0 %v1099
  %1109 = vmatpush.bf16.msra.mxu0 %v1098
  %1110 = vmatpush.bf16.msra.mxu0 %v1097
  %1111 = vmatpush.bf16.msra.mxu0 %v1096
  %1112 = vmatpush.bf16.msra.mxu0 %v1095
  %1113 = vmatpush.bf16.msra.mxu0 %v1094
  %1114 = vmatpush.bf16.msra.mxu0 %v1093
  %1115 = vmatpush.bf16.msra.mxu0 %v1092
  %1116 = vmatmul.bf16.gmra.mxu0 %v1042
  %v1117 = vpop.f32.mrf.mxu0
  %v1118 = vadd.f32 0.0, %v1117
  %v1119 = vpop.f32.mrf.mxu0
  %1120 = vdwg.mxu0
  %v1121 = vadd.f32 %v1041, %v1118
  %v1122 = vpack.c.bf16 %v722, %v722
  %s1123 = scalar_lea.vmem %s6, 320
  %v1124 = vld [vmem:[%s1123] sm:$0xf]
  %v1125 = vld [vmem:[%s1123 + $0x4] sm:$0xf]
  %v1126 = vld [vmem:[%s1123 + $0x8] sm:$0xf]
  %v1127 = vld [vmem:[%s1123 + $0xc] sm:$0xf]
  %v1128 = vld [vmem:[%s1123 + $0x10] sm:$0xf]
  %v1129 = vld [vmem:[%s1123 + $0x14] sm:$0xf]
  %v1130 = vld [vmem:[%s1123 + $0x18] sm:$0xf]
  %v1131 = vld [vmem:[%s1123 + $0x1c] sm:$0xf]
  %v1132 = vld [vmem:[%s1123 + $0x20] sm:$0xf]
  %v1133 = vld [vmem:[%s1123 + $0x24] sm:$0xf]
  %v1134 = vld [vmem:[%s1123 + $0x28] sm:$0xf]
  %v1135 = vld [vmem:[%s1123 + $0x2c] sm:$0xf]
  %v1136 = vld [vmem:[%s1123 + $0x30] sm:$0xf]
  %v1137 = vld [vmem:[%s1123 + $0x34] sm:$0xf]
  %v1138 = vld [vmem:[%s1123 + $0x38] sm:$0xf]
  %v1139 = vld [vmem:[%s1123 + $0x3c] sm:$0xf]
  %v1156 = vunpack.c.l.b16 %v1124
  %v1157 = vunpack.c.l.b16 %v1125
  %v1158 = vunpack.c.l.b16 %v1126
  %v1159 = vunpack.c.l.b16 %v1127
  %v1160 = vunpack.c.l.b16 %v1128
  %v1161 = vunpack.c.l.b16 %v1129
  %v1162 = vunpack.c.l.b16 %v1130
  %v1163 = vunpack.c.l.b16 %v1131
  %v1164 = vunpack.c.l.b16 %v1132
  %v1165 = vunpack.c.l.b16 %v1133
  %v1166 = vunpack.c.l.b16 %v1134
  %v1167 = vunpack.c.l.b16 %v1135
  %v1168 = vunpack.c.l.b16 %v1136
  %v1169 = vunpack.c.l.b16 %v1137
  %v1170 = vunpack.c.l.b16 %v1138
  %v1171 = vunpack.c.l.b16 %v1139
  %v1172 = vpack.c.b16 %v1157, %v1156
  %v1173 = vpack.c.b16 %v1159, %v1158
  %v1174 = vpack.c.b16 %v1161, %v1160
  %v1175 = vpack.c.b16 %v1163, %v1162
  %v1176 = vpack.c.b16 %v1165, %v1164
  %v1177 = vpack.c.b16 %v1167, %v1166
  %v1178 = vpack.c.b16 %v1169, %v1168
  %v1179 = vpack.c.b16 %v1171, %v1170
  %1188 = vmatpush.bf16.msra.mxu0 %v1179
  %1189 = vmatpush.bf16.msra.mxu0 %v1178
  %1190 = vmatpush.bf16.msra.mxu0 %v1177
  %1191 = vmatpush.bf16.msra.mxu0 %v1176
  %1192 = vmatpush.bf16.msra.mxu0 %v1175
  %1193 = vmatpush.bf16.msra.mxu0 %v1174
  %1194 = vmatpush.bf16.msra.mxu0 %v1173
  %1195 = vmatpush.bf16.msra.mxu0 %v1172
  %1196 = vmatmul.bf16.gmra.mxu0 %v1122
  %v1197 = vpop.f32.mrf.mxu0
  %v1198 = vadd.f32 0.0, %v1197
  %v1199 = vpop.f32.mrf.mxu0
  %1200 = vdwg.mxu0
  %v1201 = vadd.f32 %v1121, %v1198
  %v1202 = vpack.c.bf16 %v723, %v723
  %s1203 = scalar_lea.vmem %s6, 384
  %v1204 = vld [vmem:[%s1203] sm:$0xf]
  %v1205 = vld [vmem:[%s1203 + $0x4] sm:$0xf]
  %v1206 = vld [vmem:[%s1203 + $0x8] sm:$0xf]
  %v1207 = vld [vmem:[%s1203 + $0xc] sm:$0xf]
  %v1208 = vld [vmem:[%s1203 + $0x10] sm:$0xf]
  %v1209 = vld [vmem:[%s1203 + $0x14] sm:$0xf]
  %v1210 = vld [vmem:[%s1203 + $0x18] sm:$0xf]
  %v1211 = vld [vmem:[%s1203 + $0x1c] sm:$0xf]
  %v1212 = vld [vmem:[%s1203 + $0x20] sm:$0xf]
  %v1213 = vld [vmem:[%s1203 + $0x24] sm:$0xf]
  %v1214 = vld [vmem:[%s1203 + $0x28] sm:$0xf]
  %v1215 = vld [vmem:[%s1203 + $0x2c] sm:$0xf]
  %v1216 = vld [vmem:[%s1203 + $0x30] sm:$0xf]
  %v1217 = vld [vmem:[%s1203 + $0x34] sm:$0xf]
  %v1218 = vld [vmem:[%s1203 + $0x38] sm:$0xf]
  %v1219 = vld [vmem:[%s1203 + $0x3c] sm:$0xf]
  %v1236 = vunpack.c.l.b16 %v1204
  %v1237 = vunpack.c.l.b16 %v1205
  %v1238 = vunpack.c.l.b16 %v1206
  %v1239 = vunpack.c.l.b16 %v1207
  %v1240 = vunpack.c.l.b16 %v1208
  %v1241 = vunpack.c.l.b16 %v1209
  %v1242 = vunpack.c.l.b16 %v1210
  %v1243 = vunpack.c.l.b16 %v1211
  %v1244 = vunpack.c.l.b16 %v1212
  %v1245 = vunpack.c.l.b16 %v1213
  %v1246 = vunpack.c.l.b16 %v1214
  %v1247 = vunpack.c.l.b16 %v1215
  %v1248 = vunpack.c.l.b16 %v1216
  %v1249 = vunpack.c.l.b16 %v1217
  %v1250 = vunpack.c.l.b16 %v1218
  %v1251 = vunpack.c.l.b16 %v1219
  %v1252 = vpack.c.b16 %v1237, %v1236
  %v1253 = vpack.c.b16 %v1239, %v1238
  %v1254 = vpack.c.b16 %v1241, %v1240
  %v1255 = vpack.c.b16 %v1243, %v1242
  %v1256 = vpack.c.b16 %v1245, %v1244
  %v1257 = vpack.c.b16 %v1247, %v1246
  %v1258 = vpack.c.b16 %v1249, %v1248
  %v1259 = vpack.c.b16 %v1251, %v1250
  %1268 = vmatpush.bf16.msra.mxu0 %v1259
  %1269 = vmatpush.bf16.msra.mxu0 %v1258
  %1270 = vmatpush.bf16.msra.mxu0 %v1257
  %1271 = vmatpush.bf16.msra.mxu0 %v1256
  %1272 = vmatpush.bf16.msra.mxu0 %v1255
  %1273 = vmatpush.bf16.msra.mxu0 %v1254
  %1274 = vmatpush.bf16.msra.mxu0 %v1253
  %1275 = vmatpush.bf16.msra.mxu0 %v1252
  %1276 = vmatmul.bf16.gmra.mxu0 %v1202
  %v1277 = vpop.f32.mrf.mxu0
  %v1278 = vadd.f32 0.0, %v1277
  %v1279 = vpop.f32.mrf.mxu0
  %1280 = vdwg.mxu0
  %v1281 = vadd.f32 %v1201, %v1278
  %v1282 = vpack.c.bf16 %v724, %v724
  %s1283 = scalar_lea.vmem %s6, 448
  %v1284 = vld [vmem:[%s1283] sm:$0xf]
  %v1285 = vld [vmem:[%s1283 + $0x4] sm:$0xf]
  %v1286 = vld [vmem:[%s1283 + $0x8] sm:$0xf]
  %v1287 = vld [vmem:[%s1283 + $0xc] sm:$0xf]
  %v1288 = vld [vmem:[%s1283 + $0x10] sm:$0xf]
  %v1289 = vld [vmem:[%s1283 + $0x14] sm:$0xf]
  %v1290 = vld [vmem:[%s1283 + $0x18] sm:$0xf]
  %v1291 = vld [vmem:[%s1283 + $0x1c] sm:$0xf]
  %v1292 = vld [vmem:[%s1283 + $0x20] sm:$0xf]
  %v1293 = vld [vmem:[%s1283 + $0x24] sm:$0xf]
  %v1294 = vld [vmem:[%s1283 + $0x28] sm:$0xf]
  %v1295 = vld [vmem:[%s1283 + $0x2c] sm:$0xf]
  %v1296 = vld [vmem:[%s1283 + $0x30] sm:$0xf]
  %v1297 = vld [vmem:[%s1283 + $0x34] sm:$0xf]
  %v1298 = vld [vmem:[%s1283 + $0x38] sm:$0xf]
  %v1299 = vld [vmem:[%s1283 + $0x3c] sm:$0xf]
  %v1316 = vunpack.c.l.b16 %v1284
  %v1317 = vunpack.c.l.b16 %v1285
  %v1318 = vunpack.c.l.b16 %v1286
  %v1319 = vunpack.c.l.b16 %v1287
  %v1320 = vunpack.c.l.b16 %v1288
  %v1321 = vunpack.c.l.b16 %v1289
  %v1322 = vunpack.c.l.b16 %v1290
  %v1323 = vunpack.c.l.b16 %v1291
  %v1324 = vunpack.c.l.b16 %v1292
  %v1325 = vunpack.c.l.b16 %v1293
  %v1326 = vunpack.c.l.b16 %v1294
  %v1327 = vunpack.c.l.b16 %v1295
  %v1328 = vunpack.c.l.b16 %v1296
  %v1329 = vunpack.c.l.b16 %v1297
  %v1330 = vunpack.c.l.b16 %v1298
  %v1331 = vunpack.c.l.b16 %v1299
  %v1332 = vpack.c.b16 %v1317, %v1316
  %v1333 = vpack.c.b16 %v1319, %v1318
  %v1334 = vpack.c.b16 %v1321, %v1320
  %v1335 = vpack.c.b16 %v1323, %v1322
  %v1336 = vpack.c.b16 %v1325, %v1324
  %v1337 = vpack.c.b16 %v1327, %v1326
  %v1338 = vpack.c.b16 %v1329, %v1328
  %v1339 = vpack.c.b16 %v1331, %v1330
  %1348 = vmatpush.bf16.msra.mxu0 %v1339
  %1349 = vmatpush.bf16.msra.mxu0 %v1338
  %1350 = vmatpush.bf16.msra.mxu0 %v1337
  %1351 = vmatpush.bf16.msra.mxu0 %v1336
  %1352 = vmatpush.bf16.msra.mxu0 %v1335
  %1353 = vmatpush.bf16.msra.mxu0 %v1334
  %1354 = vmatpush.bf16.msra.mxu0 %v1333
  %1355 = vmatpush.bf16.msra.mxu0 %v1332
  %1356 = vmatmul.bf16.gmra.mxu0 %v1282
  %v1357 = vpop.f32.mrf.mxu0
  %v1358 = vadd.f32 0.0, %v1357
  %v1359 = vpop.f32.mrf.mxu0
  %1360 = vdwg.mxu0
  %v1361 = vadd.f32 %v1281, %v1358
  %v1362 = vld [vmem:[%s7] sm:$0x1]
  %v1364 = vperm.slane %v1362, 0
  %v1366 = vadd.f32 %v1361, %v1364
  %v1367 = vmax.f32 %v1366, 0.0
  %v1368 = vpack.c.bf16 %v1367, %v1367
  %v1369 = vld [vmem:[%s8] sm:$0xf]
  %v1370 = vld [vmem:[%s8 + $0x4] sm:$0xf]
  %v1371 = vld [vmem:[%s8 + $0x8] sm:$0xf]
  %v1372 = vld [vmem:[%s8 + $0xc] sm:$0xf]
  %v1373 = vld [vmem:[%s9] sm:$0x1]
  %v1375 = vperm.slane %v1373, 0
  %v1381 = vunpack.c.l.b16 %v1369
  %v1382 = vunpack.c.l.b16 %v1370
  %v1383 = vunpack.c.l.b16 %v1371
  %v1384 = vunpack.c.l.b16 %v1372
  %v1385 = vpack.c.b16 %v1382, %v1381
  %v1386 = vpack.c.b16 %v1384, %v1383
  %vm1389 = vcmask 261120
  %v1391 = vsel %vm1389, %v1368, 0
  %1393 = vmatpush.bf16.msra.mxu0 0
  %1394 = vmatpush.bf16.msra.mxu0 0
  %1395 = vmatpush.bf16.msra.mxu0 0
  %1396 = vmatpush.bf16.msra.mxu0 0
  %1397 = vmatpush.bf16.msra.mxu0 0
  %1398 = vmatpush.bf16.msra.mxu0 0
  %1399 = vmatpush.bf16.msra.mxu0 %v1386
  %1400 = vmatpush.bf16.msra.mxu0 %v1385
  %1401 = vmatmul.bf16.gmra.mxu0 %v1391
  %v1402 = vpop.f32.mrf.mxu0
  %v1403 = vadd.f32 %v1375, %v1402
  %v1404 = vpop.f32.mrf.mxu0
  %1405 = vdwg.mxu0
  %1406 = vst [vmem:[%s10] sm:$0xff] %v1403
  // Predicated region
  $region42: #{a_call__.1} parent=0 // pred_check
    _
  $region43: #{a_call__.1} parent=0 // pred_check_branch
    %1408 = sbr.rel (0) target = $region45
  $region44: #{a_call__.1} parent=0 // pred_region
    _
  $region45: #{a_call__.1} parent=0 // pred_fallthru
    _
  // Predicated region
  $region46: #{a_call__.1} parent=0 // pred_check
    _
  $region47: #{a_call__.1} parent=0 // pred_check_branch
    %1410 = sbr.rel (0) target = $region49
  $region48: #{a_call__.1} parent=0 // pred_region
    _
  $region49: #{a_call__.1} parent=0 // pred_fallthru
    _

</llo_original>
